<compile_context>
chip_gen: v6e
topology: v6e:2x2x1
jax: 0.10.0
libtpu: 0.0.40
codegen_flags: <defaults>
</compile_context>

<pallas_src>
import functools

import jax
import jax.numpy as jnp
from jax.experimental import pallas as pl
from jax.experimental.pallas import tpu as pltpu


# ----------------------------------------------------------------------------
# Fused kernel: convs (fwd+bwd) -> reverse -> concat -> highway -> proj
# ----------------------------------------------------------------------------
def _cnn_lm_fused_kernel(fwd_ref, bwd_ref,
                         pad_ref, cw_ref, cb_ref,
                         rpad_ref, rcw_ref, rcb_ref,
                         wn_ref, wg_ref, bn_ref, bg_ref,
                         pw_ref, pb_ref,
                         o_ref,
                         pbuf_ref,
                         *, n_cnns, window, n_highway):
    BT, T, D = fwd_ref.shape
    K = window
    Km1 = K - 1
    KD = K * D
    M = BT * T                      # (batch, time) folded into the matmul M dim

    def conv_relu(act, pad_rows, w2, b):
        # act: [BT, T, D] f32.  Write learned pad rows + activation into the
        # VMEM scratch (no HBM concat), build the im2col window, do ONE matmul.
        pbuf_ref[:, :Km1, :] = jnp.broadcast_to(pad_rows[None], (BT, Km1, D))
        pbuf_ref[:, Km1:, :] = act
        padded = pbuf_ref[...]                                   # [BT, T+K-1, D]
        win = jnp.concatenate([padded[:, k:k + T, :] for k in range(K)],
                              axis=-1)                           # [BT, T, K*D]
        y = jnp.dot(win.reshape(M, KD), w2,
                    preferred_element_type=jnp.float32) + b      # [M, D]
        return jnp.maximum(y, 0.0).reshape(BT, T, D)

    fwd = fwd_ref[...].astype(jnp.float32)
    bwd = bwd_ref[...].astype(jnp.float32)
    # TODO(synk): nn.Dropout skipped (identity, eval mode).
    for i in range(n_cnns):                                      # static layer count
        fwd = conv_relu(fwd, pad_ref[i], cw_ref[i], cb_ref[i])
        bwd = conv_relu(bwd, rpad_ref[i], rcw_ref[i], rcb_ref[i])

    # Time-reverse the backward branch with an anti-identity matmul on the MXU
    # (avoids relying on lax.rev / negative-stride gathers in Mosaic).
    rt = jax.lax.broadcasted_iota(jnp.int32, (T, T), 0)
    ct = jax.lax.broadcasted_iota(jnp.int32, (T, T), 1)
    rev = jnp.where(rt + ct == T - 1, 1.0, 0.0).astype(jnp.float32)
    rev_b = jnp.broadcast_to(rev[None], (BT, T, T))
    bwd_rev = jax.lax.dot_general(
        rev_b, bwd, dimension_numbers=(((2,), (1,)), ((0,), (0,))),
        preferred_element_type=jnp.float32)                      # [BT, T, D]

    # fwd/bwd concat on the lane axis, then fold (batch, time) into matmul rows.
    x = jnp.concatenate([fwd, bwd_rev], axis=-1).reshape(M, 2 * D)

    # Highway: separate nonlinear / gate weights -> both halves lane-aligned.
    for l in range(n_highway):                                   # static count
        nl = jnp.maximum(
            jnp.dot(x, wn_ref[l], preferred_element_type=jnp.float32) + bn_ref[l],
            0.0)
        g = jax.nn.sigmoid(
            jnp.dot(x, wg_ref[l], preferred_element_type=jnp.float32) + bg_ref[l])
        x = g * x + (1.0 - g) * nl

    out = jnp.dot(x, pw_ref[...], preferred_element_type=jnp.float32) + pb_ref[...]
    # Output stays [B, T, D] per module semantics (D=32 here -> masked store,
    # but it is a tiny fraction of the fused kernel's work).
    o_ref[...] = out.reshape(BT, T, D).astype(o_ref.dtype)


# ----------------------------------------------------------------------------
# Wrapper
# ----------------------------------------------------------------------------
def cnn_lm_forward(forward_inputs, backward_inputs, params, *,
                   n_highway, batch_tile=None):
    B, T, D = forward_inputs.shape
    n_cnns, K = params["conv_w"].shape[0], params["conv_w"].shape[1]
    KD = K * D
    n_hw_stored = params["hw_wn"].shape[0]
    assert n_highway <= n_hw_stored

    if batch_tile is None:
        # Fold (batch, time) into the matmul M dimension; target >=128 rows per
        # grid step when B allows it, while keeping the grid exact.
        batch_tile = B
        target = max(1, -(-128 // T))
        for cand in range(min(B, target), 0, -1):
            if B % cand == 0:
                batch_tile = cand
                break
    assert B % batch_tile == 0
    nb = B // batch_tile

    # Flatten conv taps for the im2col matmul: [n_cnns, K, C_in, C_out] -> [n_cnns, K*C_in, C_out]
    conv_w2 = params["conv_w"].reshape(n_cnns, KD, D)
    rconv_w2 = params["rconv_w"].reshape(n_cnns, KD, D)

    kernel = functools.partial(_cnn_lm_fused_kernel,
                               n_cnns=n_cnns, window=K, n_highway=n_highway)

    batched = lambda bi: (bi, 0, 0)
    full3 = lambda bi: (0, 0, 0)
    full2 = lambda bi: (0, 0)

    return pl.pallas_call(
        kernel,
        out_shape=jax.ShapeDtypeStruct((B, T, D), forward_inputs.dtype),
        grid=(nb,),
        in_specs=[
            pl.BlockSpec((batch_tile, T, D), batched),        # forward stream
            pl.BlockSpec((batch_tile, T, D), batched),        # backward stream
            pl.BlockSpec((n_cnns, K - 1, D), full3),          # fwd learned pads
            pl.BlockSpec((n_cnns, KD, D), full3),             # fwd conv weights (im2col)
            pl.BlockSpec((n_cnns, 1, D), full3),              # fwd conv bias
            pl.BlockSpec((n_cnns, K - 1, D), full3),          # bwd learned pads
            pl.BlockSpec((n_cnns, KD, D), full3),             # bwd conv weights
            pl.BlockSpec((n_cnns, 1, D), full3),              # bwd conv bias
            pl.BlockSpec((n_hw_stored, 2 * D, 2 * D), full3),  # highway W_nonlinear
            pl.BlockSpec((n_hw_stored, 2 * D, 2 * D), full3),  # highway W_gate
            pl.BlockSpec((n_hw_stored, 1, 2 * D), full3),      # highway b_nonlinear
            pl.BlockSpec((n_hw_stored, 1, 2 * D), full3),      # highway b_gate
            pl.BlockSpec((2 * D, D), full2),                   # proj weight
            pl.BlockSpec((1, D), full2),                       # proj bias
        ],
        out_specs=pl.BlockSpec((batch_tile, T, D), batched),
        scratch_shapes=[pltpu.VMEM((batch_tile, T + K - 1, D), jnp.float32)],
        compiler_params=pltpu.CompilerParams(
            # Batch axis 'parallel' -> shards across TensorCores on v7x megacore.
            # Working set is tiny at these shapes; raise vmem_limit_bytes only
            # when scaling T/D up (64 MiB/TC on v7x).
            dimension_semantics=("parallel",),
        ),
    )(forward_inputs, backward_inputs,
      params["pads"], conv_w2, params["conv_b"],
      params["rpads"], rconv_w2, params["rconv_b"],
      params["hw_wn"], params["hw_wg"], params["hw_bn"], params["hw_bg"],
      params["pw"], params["pb"])


# ----------------------------------------------------------------------------
# Deterministic synthetic parameters
# ----------------------------------------------------------------------------
def make_params(key, word_dim, n_cnns, window, n_highway):
    D, K = word_dim, window
    n_hw = max(1, n_highway)          # stored >= 1 so BlockSpecs are non-empty
    keys = jax.random.split(key, 12)

    def nrm(k, shape, scale=0.1):
        return (scale * jax.random.normal(k, shape)).astype(jnp.float32)

    return {
        "pads":    nrm(keys[0], (n_cnns, K - 1, D)),      # WordFeature padding rows
        "conv_w":  nrm(keys[1], (n_cnns, K, D, D)),       # [layer, tap, c_in, c_out]
        "conv_b":  nrm(keys[2], (n_cnns, 1, D)),
        "rpads":   nrm(keys[3], (n_cnns, K - 1, D)),
        "rconv_w": nrm(keys[4], (n_cnns, K, D, D)),
        "rconv_b": nrm(keys[5], (n_cnns, 1, D)),
        "hw_wn":   nrm(keys[6], (n_hw, 2 * D, 2 * D)),
        "hw_wg":   nrm(keys[7], (n_hw, 2 * D, 2 * D)),
        "hw_bn":   nrm(keys[8], (n_hw, 1, 2 * D)),
        "hw_bg":   nrm(keys[9], (n_hw, 1, 2 * D)),
        "pw":      nrm(keys[10], (2 * D, D)),
        "pb":      nrm(keys[11], (1, D)),
    }


# ----------------------------------------------------------------------------
# Pure-JAX reference (correctness check)
# ----------------------------------------------------------------------------
def _ref_forward(fwd, bwd, params, *, n_highway):
    n_cnns, K = params["conv_w"].shape[0], params["conv_w"].shape[1]
    B, T, _ = fwd.shape

    def conv_relu(x, pad, w, b):
        padp = jnp.broadcast_to(pad[None], (B,) + pad.shape)
        xp = jnp.concatenate([padp, x], axis=1)
        acc = b[0][None, None, :]
        for k in range(K):
            acc = acc + jnp.einsum("btd,df->btf", xp[:, k:k + T, :], w[k])
        return jnp.maximum(acc, 0.0)

    for i in range(n_cnns):
        fwd = conv_relu(fwd, params["pads"][i], params["conv_w"][i], params["conv_b"][i])
        bwd = conv_relu(bwd, params["rpads"][i], params["rconv_w"][i], params["rconv_b"][i])

    x = jnp.concatenate([fwd, bwd[:, ::-1, :]], axis=2)
    for l in range(n_highway):
        nl = jnp.maximum(
            jnp.einsum("btd,de->bte", x, params["hw_wn"][l]) + params["hw_bn"][l], 0.0)
        g = jax.nn.sigmoid(
            jnp.einsum("btd,de->bte", x, params["hw_wg"][l]) + params["hw_bg"][l])
        x = g * x + (1.0 - g) * nl
    return jnp.einsum("btd,de->bte", x, params["pw"]) + params["pb"][0]


if __name__ == "__main__":
    # word_dim == n_filters is structurally required by the module (the conv
    # output feeds the next conv input, and the highway width is 2*word_dim).
    B, T = 2, 8
    word_dim = 32
    n_cnns = 2
    window = 5
    n_highway = 1

    key = jax.random.PRNGKey(0)
    kf, kb, kp = jax.random.split(key, 3)
    fwd_in = jax.random.normal(kf, (B, T, word_dim), dtype=jnp.float32)
    bwd_in = jax.random.normal(kb, (B, T, word_dim), dtype=jnp.float32)
    params = make_params(kp, word_dim, n_cnns, window, n_highway)

    fwd_fn = jax.jit(functools.partial(cnn_lm_forward, n_highway=n_highway))
    out = jax.block_until_ready(fwd_fn(fwd_in, bwd_in, params))

    ref = _ref_forward(fwd_in, bwd_in, params, n_highway=n_highway)
    assert out.shape == (B, T, word_dim), out.shape
    assert jnp.allclose(out, ref, atol=1e-3, rtol=1e-3), \
        float(jnp.max(jnp.abs(out - ref)))

    print("KERNEL_OK")
</pallas_src>

<mosaic_0001>
module attributes {stable_mosaic.version = 11 : i64} {
  func.func @_cnn_lm_fused_kernel(%arg0: i32, %arg1: memref<2x8x32xf32, #tpu.memory_space<vmem>>, %arg2: memref<2x8x32xf32, #tpu.memory_space<vmem>>, %arg3: memref<2x4x32xf32, #tpu.memory_space<vmem>>, %arg4: memref<2x160x32xf32, #tpu.memory_space<vmem>>, %arg5: memref<2x1x32xf32, #tpu.memory_space<vmem>>, %arg6: memref<2x4x32xf32, #tpu.memory_space<vmem>>, %arg7: memref<2x160x32xf32, #tpu.memory_space<vmem>>, %arg8: memref<2x1x32xf32, #tpu.memory_space<vmem>>, %arg9: memref<1x64x64xf32, #tpu.memory_space<vmem>>, %arg10: memref<1x64x64xf32, #tpu.memory_space<vmem>>, %arg11: memref<1x1x64xf32, #tpu.memory_space<vmem>>, %arg12: memref<1x1x64xf32, #tpu.memory_space<vmem>>, %arg13: memref<64x32xf32, #tpu.memory_space<vmem>>, %arg14: memref<1x32xf32, #tpu.memory_space<vmem>>, %arg15: memref<2x8x32xf32, #tpu.memory_space<vmem>>, %arg16: memref<2x12x32xf32, #tpu.memory_space<vmem>>) attributes {dimension_semantics = [#tpu.dimension_semantics<parallel>], iteration_bounds = array<i64: 1>, scalar_prefetch = 0 : i64, scratch_operands = 1 : i64, tpu.core_type = #tpu.core_type<tc>, window_params = [{transform_indices = @transform_0, window_bounds = array<i64: 2, 8, 32>}, {transform_indices = @transform_1, window_bounds = array<i64: 2, 8, 32>}, {pipeline_mode = #tpu.pipeline_mode<synchronous>, transform_indices = @transform_2, window_bounds = array<i64: 2, 4, 32>}, {pipeline_mode = #tpu.pipeline_mode<synchronous>, transform_indices = @transform_3, window_bounds = array<i64: 2, 160, 32>}, {pipeline_mode = #tpu.pipeline_mode<synchronous>, transform_indices = @transform_4, window_bounds = array<i64: 2, 1, 32>}, {pipeline_mode = #tpu.pipeline_mode<synchronous>, transform_indices = @transform_5, window_bounds = array<i64: 2, 4, 32>}, {pipeline_mode = #tpu.pipeline_mode<synchronous>, transform_indices = @transform_6, window_bounds = array<i64: 2, 160, 32>}, {pipeline_mode = #tpu.pipeline_mode<synchronous>, transform_indices = @transform_7, window_bounds = array<i64: 2, 1, 32>}, {pipeline_mode = #tpu.pipeline_mode<synchronous>, transform_indices = @transform_8, window_bounds = array<i64: 1, 64, 64>}, {pipeline_mode = #tpu.pipeline_mode<synchronous>, transform_indices = @transform_9, window_bounds = array<i64: 1, 64, 64>}, {pipeline_mode = #tpu.pipeline_mode<synchronous>, transform_indices = @transform_10, window_bounds = array<i64: 1, 1, 64>}, {pipeline_mode = #tpu.pipeline_mode<synchronous>, transform_indices = @transform_11, window_bounds = array<i64: 1, 1, 64>}, {pipeline_mode = #tpu.pipeline_mode<synchronous>, transform_indices = @transform_12, window_bounds = array<i64: 64, 32>}, {pipeline_mode = #tpu.pipeline_mode<synchronous>, transform_indices = @transform_13, window_bounds = array<i64: 1, 32>}, {transform_indices = @transform_14, window_bounds = array<i64: 2, 8, 32>}]} {
    %c0 = arith.constant 0 : index
    %c0_0 = arith.constant 0 : index
    %c0_1 = arith.constant 0 : index
    %0 = vector.load %arg1[%c0, %c0_0, %c0_1] : memref<2x8x32xf32, #tpu.memory_space<vmem>>, vector<2x8x32xf32>
    %c0_2 = arith.constant 0 : index
    %c0_3 = arith.constant 0 : index
    %c0_4 = arith.constant 0 : index
    %1 = vector.load %arg2[%c0_2, %c0_3, %c0_4] : memref<2x8x32xf32, #tpu.memory_space<vmem>>, vector<2x8x32xf32>
    %c0_5 = arith.constant 0 : index
    %c0_6 = arith.constant 0 : index
    %c0_7 = arith.constant 0 : index
    %2 = vector.load %arg3[%c0_5, %c0_6, %c0_7] : memref<2x4x32xf32, #tpu.memory_space<vmem>>, vector<1x4x32xf32>
    %3 = vector.shape_cast %2 : vector<1x4x32xf32> to vector<4x32xf32>
    %c0_8 = arith.constant 0 : index
    %c0_9 = arith.constant 0 : index
    %c0_10 = arith.constant 0 : index
    %4 = vector.load %arg4[%c0_8, %c0_9, %c0_10] : memref<2x160x32xf32, #tpu.memory_space<vmem>>, vector<1x160x32xf32>
    %5 = vector.shape_cast %4 : vector<1x160x32xf32> to vector<160x32xf32>
    %c0_11 = arith.constant 0 : index
    %c0_12 = arith.constant 0 : index
    %c0_13 = arith.constant 0 : index
    %6 = vector.load %arg5[%c0_11, %c0_12, %c0_13] : memref<2x1x32xf32, #tpu.memory_space<vmem>>, vector<1x1x32xf32>
    %7 = vector.shape_cast %6 : vector<1x1x32xf32> to vector<1x32xf32>
    %8 = vector.shape_cast %3 : vector<4x32xf32> to vector<1x4x32xf32>
    %9 = vector.shape_cast %8 : vector<1x4x32xf32> to vector<1x4x32xf32>
    %10 = vector.broadcast %9 : vector<1x4x32xf32> to vector<2x4x32xf32>
    %c0_14 = arith.constant 0 : index
    %c0_15 = arith.constant 0 : index
    %c0_16 = arith.constant 0 : index
    %11 = vector.load %arg16[%c0_14, %c0_15, %c0_16] : memref<2x12x32xf32, #tpu.memory_space<vmem>>, vector<2x4x32xf32>
    tpu.vector_store %arg16[%c0_14, %c0_15, %c0_16], %10 {strides = array<i32>} : memref<2x12x32xf32, #tpu.memory_space<vmem>>, vector<2x4x32xf32>,
    %c0_17 = arith.constant 0 : index
    %c4 = arith.constant 4 : index
    %c0_18 = arith.constant 0 : index
    %12 = vector.load %arg16[%c0_17, %c4, %c0_18] : memref<2x12x32xf32, #tpu.memory_space<vmem>>, vector<2x8x32xf32>
    tpu.vector_store %arg16[%c0_17, %c4, %c0_18], %0 {strides = array<i32>} : memref<2x12x32xf32, #tpu.memory_space<vmem>>, vector<2x8x32xf32>,
    %c0_19 = arith.constant 0 : index
    %c0_20 = arith.constant 0 : index
    %c0_21 = arith.constant 0 : index
    %13 = vector.load %arg16[%c0_19, %c0_20, %c0_21] : memref<2x12x32xf32, #tpu.memory_space<vmem>>, vector<2x12x32xf32>
    %14 = vector.extract_strided_slice %13 {offsets = [0, 0, 0], sizes = [2, 8, 32], strides = [1, 1, 1]} : vector<2x12x32xf32> to vector<2x8x32xf32>
    %15 = vector.extract_strided_slice %13 {offsets = [0, 1, 0], sizes = [2, 8, 32], strides = [1, 1, 1]} : vector<2x12x32xf32> to vector<2x8x32xf32>
    %16 = vector.extract_strided_slice %13 {offsets = [0, 2, 0], sizes = [2, 8, 32], strides = [1, 1, 1]} : vector<2x12x32xf32> to vector<2x8x32xf32>
    %17 = vector.extract_strided_slice %13 {offsets = [0, 3, 0], sizes = [2, 8, 32], strides = [1, 1, 1]} : vector<2x12x32xf32> to vector<2x8x32xf32>
    %18 = vector.extract_strided_slice %13 {offsets = [0, 4, 0], sizes = [2, 8, 32], strides = [1, 1, 1]} : vector<2x12x32xf32> to vector<2x8x32xf32>
    %19 = tpu.concatenate %14, %15, %16, %17, %18 in 2 : vector<2x8x32xf32>, vector<2x8x32xf32>, vector<2x8x32xf32>, vector<2x8x32xf32>, vector<2x8x32xf32> -> vector<2x8x160xf32>
    %20 = vector.shape_cast %19 : vector<2x8x160xf32> to vector<16x160xf32>
    %cst = arith.constant dense<0.000000e+00> : vector<16x32xf32>
    %21 = tpu.matmul %20, %5, %cst {dimension_numbers = #tpu.dot_dimension_numbers<[1], [0], [0], [1], [0, 0, 1, 1], [], []>} : vector<16x160xf32>, vector<160x32xf32>, vector<16x32xf32> -> vector<16x32xf32>
    %22 = vector.broadcast %7 : vector<1x32xf32> to vector<16x32xf32>
    %23 = arith.addf %21, %22 : vector<16x32xf32>
    %cst_22 = arith.constant 0.000000e+00 : f32
    %24 = vector.broadcast %cst_22 : f32 to vector<16x32xf32>
    %25 = arith.maximumf %23, %24 : vector<16x32xf32>
    %26 = vector.shape_cast %25 : vector<16x32xf32> to vector<2x8x32xf32>
    %c0_23 = arith.constant 0 : index
    %c0_24 = arith.constant 0 : index
    %c0_25 = arith.constant 0 : index
    %27 = vector.load %arg6[%c0_23, %c0_24, %c0_25] : memref<2x4x32xf32, #tpu.memory_space<vmem>>, vector<1x4x32xf32>
    %28 = vector.shape_cast %27 : vector<1x4x32xf32> to vector<4x32xf32>
    %c0_26 = arith.constant 0 : index
    %c0_27 = arith.constant 0 : index
    %c0_28 = arith.constant 0 : index
    %29 = vector.load %arg7[%c0_26, %c0_27, %c0_28] : memref<2x160x32xf32, #tpu.memory_space<vmem>>, vector<1x160x32xf32>
    %30 = vector.shape_cast %29 : vector<1x160x32xf32> to vector<160x32xf32>
    %c0_29 = arith.constant 0 : index
    %c0_30 = arith.constant 0 : index
    %c0_31 = arith.constant 0 : index
    %31 = vector.load %arg8[%c0_29, %c0_30, %c0_31] : memref<2x1x32xf32, #tpu.memory_space<vmem>>, vector<1x1x32xf32>
    %32 = vector.shape_cast %31 : vector<1x1x32xf32> to vector<1x32xf32>
    %33 = vector.shape_cast %28 : vector<4x32xf32> to vector<1x4x32xf32>
    %34 = vector.shape_cast %33 : vector<1x4x32xf32> to vector<1x4x32xf32>
    %35 = vector.broadcast %34 : vector<1x4x32xf32> to vector<2x4x32xf32>
    %c0_32 = arith.constant 0 : index
    %c0_33 = arith.constant 0 : index
    %c0_34 = arith.constant 0 : index
    %36 = vector.load %arg16[%c0_32, %c0_33, %c0_34] : memref<2x12x32xf32, #tpu.memory_space<vmem>>, vector<2x4x32xf32>
    tpu.vector_store %arg16[%c0_32, %c0_33, %c0_34], %35 {strides = array<i32>} : memref<2x12x32xf32, #tpu.memory_space<vmem>>, vector<2x4x32xf32>,
    %c0_35 = arith.constant 0 : index
    %c4_36 = arith.constant 4 : index
    %c0_37 = arith.constant 0 : index
    %37 = vector.load %arg16[%c0_35, %c4_36, %c0_37] : memref<2x12x32xf32, #tpu.memory_space<vmem>>, vector<2x8x32xf32>
    tpu.vector_store %arg16[%c0_35, %c4_36, %c0_37], %1 {strides = array<i32>} : memref<2x12x32xf32, #tpu.memory_space<vmem>>, vector<2x8x32xf32>,
    %c0_38 = arith.constant 0 : index
    %c0_39 = arith.constant 0 : index
    %c0_40 = arith.constant 0 : index
    %38 = vector.load %arg16[%c0_38, %c0_39, %c0_40] : memref<2x12x32xf32, #tpu.memory_space<vmem>>, vector<2x12x32xf32>
    %39 = vector.extract_strided_slice %38 {offsets = [0, 0, 0], sizes = [2, 8, 32], strides = [1, 1, 1]} : vector<2x12x32xf32> to vector<2x8x32xf32>
    %40 = vector.extract_strided_slice %38 {offsets = [0, 1, 0], sizes = [2, 8, 32], strides = [1, 1, 1]} : vector<2x12x32xf32> to vector<2x8x32xf32>
    %41 = vector.extract_strided_slice %38 {offsets = [0, 2, 0], sizes = [2, 8, 32], strides = [1, 1, 1]} : vector<2x12x32xf32> to vector<2x8x32xf32>
    %42 = vector.extract_strided_slice %38 {offsets = [0, 3, 0], sizes = [2, 8, 32], strides = [1, 1, 1]} : vector<2x12x32xf32> to vector<2x8x32xf32>
    %43 = vector.extract_strided_slice %38 {offsets = [0, 4, 0], sizes = [2, 8, 32], strides = [1, 1, 1]} : vector<2x12x32xf32> to vector<2x8x32xf32>
    %44 = tpu.concatenate %39, %40, %41, %42, %43 in 2 : vector<2x8x32xf32>, vector<2x8x32xf32>, vector<2x8x32xf32>, vector<2x8x32xf32>, vector<2x8x32xf32> -> vector<2x8x160xf32>
    %45 = vector.shape_cast %44 : vector<2x8x160xf32> to vector<16x160xf32>
    %cst_41 = arith.constant dense<0.000000e+00> : vector<16x32xf32>
    %46 = tpu.matmul %45, %30, %cst_41 {dimension_numbers = #tpu.dot_dimension_numbers<[1], [0], [0], [1], [0, 0, 1, 1], [], []>} : vector<16x160xf32>, vector<160x32xf32>, vector<16x32xf32> -> vector<16x32xf32>
    %47 = vector.broadcast %32 : vector<1x32xf32> to vector<16x32xf32>
    %48 = arith.addf %46, %47 : vector<16x32xf32>
    %cst_42 = arith.constant 0.000000e+00 : f32
    %49 = vector.broadcast %cst_42 : f32 to vector<16x32xf32>
    %50 = arith.maximumf %48, %49 : vector<16x32xf32>
    %51 = vector.shape_cast %50 : vector<16x32xf32> to vector<2x8x32xf32>
    %c1 = arith.constant 1 : index
    %c0_43 = arith.constant 0 : index
    %c0_44 = arith.constant 0 : index
    %52 = vector.load %arg3[%c1, %c0_43, %c0_44] : memref<2x4x32xf32, #tpu.memory_space<vmem>>, vector<1x4x32xf32>
    %53 = vector.shape_cast %52 : vector<1x4x32xf32> to vector<4x32xf32>
    %c1_45 = arith.constant 1 : index
    %c0_46 = arith.constant 0 : index
    %c0_47 = arith.constant 0 : index
    %54 = vector.load %arg4[%c1_45, %c0_46, %c0_47] : memref<2x160x32xf32, #tpu.memory_space<vmem>>, vector<1x160x32xf32>
    %55 = vector.shape_cast %54 : vector<1x160x32xf32> to vector<160x32xf32>
    %c1_48 = arith.constant 1 : index
    %c0_49 = arith.constant 0 : index
    %c0_50 = arith.constant 0 : index
    %56 = vector.load %arg5[%c1_48, %c0_49, %c0_50] : memref<2x1x32xf32, #tpu.memory_space<vmem>>, vector<1x1x32xf32>
    %57 = vector.shape_cast %56 : vector<1x1x32xf32> to vector<1x32xf32>
    %58 = vector.shape_cast %53 : vector<4x32xf32> to vector<1x4x32xf32>
    %59 = vector.shape_cast %58 : vector<1x4x32xf32> to vector<1x4x32xf32>
    %60 = vector.broadcast %59 : vector<1x4x32xf32> to vector<2x4x32xf32>
    %c0_51 = arith.constant 0 : index
    %c0_52 = arith.constant 0 : index
    %c0_53 = arith.constant 0 : index
    %61 = vector.load %arg16[%c0_51, %c0_52, %c0_53] : memref<2x12x32xf32, #tpu.memory_space<vmem>>, vector<2x4x32xf32>
    tpu.vector_store %arg16[%c0_51, %c0_52, %c0_53], %60 {strides = array<i32>} : memref<2x12x32xf32, #tpu.memory_space<vmem>>, vector<2x4x32xf32>,
    %c0_54 = arith.constant 0 : index
    %c4_55 = arith.constant 4 : index
    %c0_56 = arith.constant 0 : index
    %62 = vector.load %arg16[%c0_54, %c4_55, %c0_56] : memref<2x12x32xf32, #tpu.memory_space<vmem>>, vector<2x8x32xf32>
    tpu.vector_store %arg16[%c0_54, %c4_55, %c0_56], %26 {strides = array<i32>} : memref<2x12x32xf32, #tpu.memory_space<vmem>>, vector<2x8x32xf32>,
    %c0_57 = arith.constant 0 : index
    %c0_58 = arith.constant 0 : index
    %c0_59 = arith.constant 0 : index
    %63 = vector.load %arg16[%c0_57, %c0_58, %c0_59] : memref<2x12x32xf32, #tpu.memory_space<vmem>>, vector<2x12x32xf32>
    %64 = vector.extract_strided_slice %63 {offsets = [0, 0, 0], sizes = [2, 8, 32], strides = [1, 1, 1]} : vector<2x12x32xf32> to vector<2x8x32xf32>
    %65 = vector.extract_strided_slice %63 {offsets = [0, 1, 0], sizes = [2, 8, 32], strides = [1, 1, 1]} : vector<2x12x32xf32> to vector<2x8x32xf32>
    %66 = vector.extract_strided_slice %63 {offsets = [0, 2, 0], sizes = [2, 8, 32], strides = [1, 1, 1]} : vector<2x12x32xf32> to vector<2x8x32xf32>
    %67 = vector.extract_strided_slice %63 {offsets = [0, 3, 0], sizes = [2, 8, 32], strides = [1, 1, 1]} : vector<2x12x32xf32> to vector<2x8x32xf32>
    %68 = vector.extract_strided_slice %63 {offsets = [0, 4, 0], sizes = [2, 8, 32], strides = [1, 1, 1]} : vector<2x12x32xf32> to vector<2x8x32xf32>
    %69 = tpu.concatenate %64, %65, %66, %67, %68 in 2 : vector<2x8x32xf32>, vector<2x8x32xf32>, vector<2x8x32xf32>, vector<2x8x32xf32>, vector<2x8x32xf32> -> vector<2x8x160xf32>
    %70 = vector.shape_cast %69 : vector<2x8x160xf32> to vector<16x160xf32>
    %cst_60 = arith.constant dense<0.000000e+00> : vector<16x32xf32>
    %71 = tpu.matmul %70, %55, %cst_60 {dimension_numbers = #tpu.dot_dimension_numbers<[1], [0], [0], [1], [0, 0, 1, 1], [], []>} : vector<16x160xf32>, vector<160x32xf32>, vector<16x32xf32> -> vector<16x32xf32>
    %72 = vector.broadcast %57 : vector<1x32xf32> to vector<16x32xf32>
    %73 = arith.addf %71, %72 : vector<16x32xf32>
    %cst_61 = arith.constant 0.000000e+00 : f32
    %74 = vector.broadcast %cst_61 : f32 to vector<16x32xf32>
    %75 = arith.maximumf %73, %74 : vector<16x32xf32>
    %76 = vector.shape_cast %75 : vector<16x32xf32> to vector<2x8x32xf32>
    %c1_62 = arith.constant 1 : index
    %c0_63 = arith.constant 0 : index
    %c0_64 = arith.constant 0 : index
    %77 = vector.load %arg6[%c1_62, %c0_63, %c0_64] : memref<2x4x32xf32, #tpu.memory_space<vmem>>, vector<1x4x32xf32>
    %78 = vector.shape_cast %77 : vector<1x4x32xf32> to vector<4x32xf32>
    %c1_65 = arith.constant 1 : index
    %c0_66 = arith.constant 0 : index
    %c0_67 = arith.constant 0 : index
    %79 = vector.load %arg7[%c1_65, %c0_66, %c0_67] : memref<2x160x32xf32, #tpu.memory_space<vmem>>, vector<1x160x32xf32>
    %80 = vector.shape_cast %79 : vector<1x160x32xf32> to vector<160x32xf32>
    %c1_68 = arith.constant 1 : index
    %c0_69 = arith.constant 0 : index
    %c0_70 = arith.constant 0 : index
    %81 = vector.load %arg8[%c1_68, %c0_69, %c0_70] : memref<2x1x32xf32, #tpu.memory_space<vmem>>, vector<1x1x32xf32>
    %82 = vector.shape_cast %81 : vector<1x1x32xf32> to vector<1x32xf32>
    %83 = vector.shape_cast %78 : vector<4x32xf32> to vector<1x4x32xf32>
    %84 = vector.shape_cast %83 : vector<1x4x32xf32> to vector<1x4x32xf32>
    %85 = vector.broadcast %84 : vector<1x4x32xf32> to vector<2x4x32xf32>
    %c0_71 = arith.constant 0 : index
    %c0_72 = arith.constant 0 : index
    %c0_73 = arith.constant 0 : index
    %86 = vector.load %arg16[%c0_71, %c0_72, %c0_73] : memref<2x12x32xf32, #tpu.memory_space<vmem>>, vector<2x4x32xf32>
    tpu.vector_store %arg16[%c0_71, %c0_72, %c0_73], %85 {strides = array<i32>} : memref<2x12x32xf32, #tpu.memory_space<vmem>>, vector<2x4x32xf32>,
    %c0_74 = arith.constant 0 : index
    %c4_75 = arith.constant 4 : index
    %c0_76 = arith.constant 0 : index
    %87 = vector.load %arg16[%c0_74, %c4_75, %c0_76] : memref<2x12x32xf32, #tpu.memory_space<vmem>>, vector<2x8x32xf32>
    tpu.vector_store %arg16[%c0_74, %c4_75, %c0_76], %51 {strides = array<i32>} : memref<2x12x32xf32, #tpu.memory_space<vmem>>, vector<2x8x32xf32>,
    %c0_77 = arith.constant 0 : index
    %c0_78 = arith.constant 0 : index
    %c0_79 = arith.constant 0 : index
    %88 = vector.load %arg16[%c0_77, %c0_78, %c0_79] : memref<2x12x32xf32, #tpu.memory_space<vmem>>, vector<2x12x32xf32>
    %89 = vector.extract_strided_slice %88 {offsets = [0, 0, 0], sizes = [2, 8, 32], strides = [1, 1, 1]} : vector<2x12x32xf32> to vector<2x8x32xf32>
    %90 = vector.extract_strided_slice %88 {offsets = [0, 1, 0], sizes = [2, 8, 32], strides = [1, 1, 1]} : vector<2x12x32xf32> to vector<2x8x32xf32>
    %91 = vector.extract_strided_slice %88 {offsets = [0, 2, 0], sizes = [2, 8, 32], strides = [1, 1, 1]} : vector<2x12x32xf32> to vector<2x8x32xf32>
    %92 = vector.extract_strided_slice %88 {offsets = [0, 3, 0], sizes = [2, 8, 32], strides = [1, 1, 1]} : vector<2x12x32xf32> to vector<2x8x32xf32>
    %93 = vector.extract_strided_slice %88 {offsets = [0, 4, 0], sizes = [2, 8, 32], strides = [1, 1, 1]} : vector<2x12x32xf32> to vector<2x8x32xf32>
    %94 = tpu.concatenate %89, %90, %91, %92, %93 in 2 : vector<2x8x32xf32>, vector<2x8x32xf32>, vector<2x8x32xf32>, vector<2x8x32xf32>, vector<2x8x32xf32> -> vector<2x8x160xf32>
    %95 = vector.shape_cast %94 : vector<2x8x160xf32> to vector<16x160xf32>
    %cst_80 = arith.constant dense<0.000000e+00> : vector<16x32xf32>
    %96 = tpu.matmul %95, %80, %cst_80 {dimension_numbers = #tpu.dot_dimension_numbers<[1], [0], [0], [1], [0, 0, 1, 1], [], []>} : vector<16x160xf32>, vector<160x32xf32>, vector<16x32xf32> -> vector<16x32xf32>
    %97 = vector.broadcast %82 : vector<1x32xf32> to vector<16x32xf32>
    %98 = arith.addf %96, %97 : vector<16x32xf32>
    %cst_81 = arith.constant 0.000000e+00 : f32
    %99 = vector.broadcast %cst_81 : f32 to vector<16x32xf32>
    %100 = arith.maximumf %98, %99 : vector<16x32xf32>
    %101 = vector.shape_cast %100 : vector<16x32xf32> to vector<2x8x32xf32>
    %102 = tpu.iota {dimensions = array<i32: 0>} : vector<8x8xi32>
    %103 = tpu.iota {dimensions = array<i32: 1>} : vector<8x8xi32>
    %104 = arith.addi %102, %103 : vector<8x8xi32>
    %c7_i32 = arith.constant 7 : i32
    %105 = vector.broadcast %c7_i32 : i32 to vector<8x8xi32>
    %106 = arith.cmpi eq, %104, %105 : vector<8x8xi32>
    %cst_82 = arith.constant 1.000000e+00 : f32
    %cst_83 = arith.constant 0.000000e+00 : f32
    %107 = vector.broadcast %cst_82 : f32 to vector<8x8xf32>
    %108 = vector.broadcast %cst_83 : f32 to vector<8x8xf32>
    %109 = arith.select %106, %107, %108 : vector<8x8xi1>, vector<8x8xf32>
    %110 = vector.shape_cast %109 : vector<8x8xf32> to vector<1x8x8xf32>
    %111 = vector.shape_cast %110 : vector<1x8x8xf32> to vector<1x8x8xf32>
    %112 = vector.broadcast %111 : vector<1x8x8xf32> to vector<2x8x8xf32>
    %cst_84 = arith.constant dense<0.000000e+00> : vector<2x8x32xf32>
    %113 = tpu.matmul %112, %101, %cst_84 {dimension_numbers = #tpu.dot_dimension_numbers<[2], [1], [1], [2], [0, 0, 0, 1, 1, 2], [0], [0]>} : vector<2x8x8xf32>, vector<2x8x32xf32>, vector<2x8x32xf32> -> vector<2x8x32xf32>
    %114 = tpu.concatenate %76, %113 in 2 : vector<2x8x32xf32>, vector<2x8x32xf32> -> vector<2x8x64xf32>
    %115 = vector.shape_cast %114 : vector<2x8x64xf32> to vector<16x64xf32>
    %c0_85 = arith.constant 0 : index
    %c0_86 = arith.constant 0 : index
    %c0_87 = arith.constant 0 : index
    %116 = vector.load %arg9[%c0_85, %c0_86, %c0_87] : memref<1x64x64xf32, #tpu.memory_space<vmem>>, vector<1x64x64xf32>
    %117 = vector.shape_cast %116 : vector<1x64x64xf32> to vector<64x64xf32>
    %cst_88 = arith.constant dense<0.000000e+00> : vector<16x64xf32>
    %118 = tpu.matmul %115, %117, %cst_88 {dimension_numbers = #tpu.dot_dimension_numbers<[1], [0], [0], [1], [0, 0, 1, 1], [], []>} : vector<16x64xf32>, vector<64x64xf32>, vector<16x64xf32> -> vector<16x64xf32>
    %c0_89 = arith.constant 0 : index
    %c0_90 = arith.constant 0 : index
    %c0_91 = arith.constant 0 : index
    %119 = vector.load %arg11[%c0_89, %c0_90, %c0_91] : memref<1x1x64xf32, #tpu.memory_space<vmem>>, vector<1x1x64xf32>
    %120 = vector.shape_cast %119 : vector<1x1x64xf32> to vector<1x64xf32>
    %121 = vector.broadcast %120 : vector<1x64xf32> to vector<16x64xf32>
    %122 = arith.addf %118, %121 : vector<16x64xf32>
    %cst_92 = arith.constant 0.000000e+00 : f32
    %123 = vector.broadcast %cst_92 : f32 to vector<16x64xf32>
    %124 = arith.maximumf %122, %123 : vector<16x64xf32>
    %c0_93 = arith.constant 0 : index
    %c0_94 = arith.constant 0 : index
    %c0_95 = arith.constant 0 : index
    %125 = vector.load %arg10[%c0_93, %c0_94, %c0_95] : memref<1x64x64xf32, #tpu.memory_space<vmem>>, vector<1x64x64xf32>
    %126 = vector.shape_cast %125 : vector<1x64x64xf32> to vector<64x64xf32>
    %cst_96 = arith.constant dense<0.000000e+00> : vector<16x64xf32>
    %127 = tpu.matmul %115, %126, %cst_96 {dimension_numbers = #tpu.dot_dimension_numbers<[1], [0], [0], [1], [0, 0, 1, 1], [], []>} : vector<16x64xf32>, vector<64x64xf32>, vector<16x64xf32> -> vector<16x64xf32>
    %c0_97 = arith.constant 0 : index
    %c0_98 = arith.constant 0 : index
    %c0_99 = arith.constant 0 : index
    %128 = vector.load %arg12[%c0_97, %c0_98, %c0_99] : memref<1x1x64xf32, #tpu.memory_space<vmem>>, vector<1x1x64xf32>
    %129 = vector.shape_cast %128 : vector<1x1x64xf32> to vector<1x64xf32>
    %130 = vector.broadcast %129 : vector<1x64xf32> to vector<16x64xf32>
    %131 = arith.addf %127, %130 : vector<16x64xf32>
    %132 = arith.negf %131 : vector<16x64xf32>
    %133 = math.exp %132 : vector<16x64xf32>
    %cst_100 = arith.constant 1.000000e+00 : f32
    %134 = vector.broadcast %cst_100 : f32 to vector<16x64xf32>
    %135 = arith.addf %134, %133 : vector<16x64xf32>
    %136 = arith.divf %134, %135 : vector<16x64xf32>
    %137 = arith.mulf %136, %115 : vector<16x64xf32>
    %cst_101 = arith.constant 1.000000e+00 : f32
    %138 = vector.broadcast %cst_101 : f32 to vector<16x64xf32>
    %139 = arith.subf %138, %136 : vector<16x64xf32>
    %140 = arith.mulf %139, %124 : vector<16x64xf32>
    %141 = arith.addf %137, %140 : vector<16x64xf32>
    %c0_102 = arith.constant 0 : index
    %c0_103 = arith.constant 0 : index
    %142 = vector.load %arg13[%c0_102, %c0_103] : memref<64x32xf32, #tpu.memory_space<vmem>>, vector<64x32xf32>
    %cst_104 = arith.constant dense<0.000000e+00> : vector<16x32xf32>
    %143 = tpu.matmul %141, %142, %cst_104 {dimension_numbers = #tpu.dot_dimension_numbers<[1], [0], [0], [1], [0, 0, 1, 1], [], []>} : vector<16x64xf32>, vector<64x32xf32>, vector<16x32xf32> -> vector<16x32xf32>
    %c0_105 = arith.constant 0 : index
    %c0_106 = arith.constant 0 : index
    %144 = vector.load %arg14[%c0_105, %c0_106] : memref<1x32xf32, #tpu.memory_space<vmem>>, vector<1x32xf32>
    %145 = vector.broadcast %144 : vector<1x32xf32> to vector<16x32xf32>
    %146 = arith.addf %143, %145 : vector<16x32xf32>
    %147 = vector.shape_cast %146 : vector<16x32xf32> to vector<2x8x32xf32>
    %c0_107 = arith.constant 0 : index
    %c0_108 = arith.constant 0 : index
    %c0_109 = arith.constant 0 : index
    %148 = vector.load %arg15[%c0_107, %c0_108, %c0_109] : memref<2x8x32xf32, #tpu.memory_space<vmem>>, vector<2x8x32xf32>
    tpu.vector_store %arg15[%c0_107, %c0_108, %c0_109], %147 {strides = array<i32>} : memref<2x8x32xf32, #tpu.memory_space<vmem>>, vector<2x8x32xf32>,
    return
  }
  func.func @transform_0(%arg0: i32) -> (i32, i32, i32) {
    %c0_i32 = arith.constant 0 : i32
    %c0_i32_0 = arith.constant 0 : i32
    %c0_i32_1 = arith.constant 0 : i32
    return %arg0, %c0_i32, %c0_i32_0 : i32, i32, i32
  }
  func.func @transform_1(%arg0: i32) -> (i32, i32, i32) {
    %c0_i32 = arith.constant 0 : i32
    %c0_i32_0 = arith.constant 0 : i32
    %c0_i32_1 = arith.constant 0 : i32
    return %arg0, %c0_i32, %c0_i32_0 : i32, i32, i32
  }
  func.func @transform_2(%arg0: i32) -> (i32, i32, i32) {
    %c0_i32 = arith.constant 0 : i32
    %c0_i32_0 = arith.constant 0 : i32
    %c0_i32_1 = arith.constant 0 : i32
    %c0_i32_2 = arith.constant 0 : i32
    return %c0_i32, %c0_i32_0, %c0_i32_1 : i32, i32, i32
  }
  func.func @transform_3(%arg0: i32) -> (i32, i32, i32) {
    %c0_i32 = arith.constant 0 : i32
    %c0_i32_0 = arith.constant 0 : i32
    %c0_i32_1 = arith.constant 0 : i32
    %c0_i32_2 = arith.constant 0 : i32
    return %c0_i32, %c0_i32_0, %c0_i32_1 : i32, i32, i32
  }
  func.func @transform_4(%arg0: i32) -> (i32, i32, i32) {
    %c0_i32 = arith.constant 0 : i32
    %c0_i32_0 = arith.constant 0 : i32
    %c0_i32_1 = arith.constant 0 : i32
    %c0_i32_2 = arith.constant 0 : i32
    return %c0_i32, %c0_i32_0, %c0_i32_1 : i32, i32, i32
  }
  func.func @transform_5(%arg0: i32) -> (i32, i32, i32) {
    %c0_i32 = arith.constant 0 : i32
    %c0_i32_0 = arith.constant 0 : i32
    %c0_i32_1 = arith.constant 0 : i32
    %c0_i32_2 = arith.constant 0 : i32
    return %c0_i32, %c0_i32_0, %c0_i32_1 : i32, i32, i32
  }
  func.func @transform_6(%arg0: i32) -> (i32, i32, i32) {
    %c0_i32 = arith.constant 0 : i32
    %c0_i32_0 = arith.constant 0 : i32
    %c0_i32_1 = arith.constant 0 : i32
    %c0_i32_2 = arith.constant 0 : i32
    return %c0_i32, %c0_i32_0, %c0_i32_1 : i32, i32, i32
  }
  func.func @transform_7(%arg0: i32) -> (i32, i32, i32) {
    %c0_i32 = arith.constant 0 : i32
    %c0_i32_0 = arith.constant 0 : i32
    %c0_i32_1 = arith.constant 0 : i32
    %c0_i32_2 = arith.constant 0 : i32
    return %c0_i32, %c0_i32_0, %c0_i32_1 : i32, i32, i32
  }
  func.func @transform_8(%arg0: i32) -> (i32, i32, i32) {
    %c0_i32 = arith.constant 0 : i32
    %c0_i32_0 = arith.constant 0 : i32
    %c0_i32_1 = arith.constant 0 : i32
    %c0_i32_2 = arith.constant 0 : i32
    return %c0_i32, %c0_i32_0, %c0_i32_1 : i32, i32, i32
  }
  func.func @transform_9(%arg0: i32) -> (i32, i32, i32) {
    %c0_i32 = arith.constant 0 : i32
    %c0_i32_0 = arith.constant 0 : i32
    %c0_i32_1 = arith.constant 0 : i32
    %c0_i32_2 = arith.constant 0 : i32
    return %c0_i32, %c0_i32_0, %c0_i32_1 : i32, i32, i32
  }
  func.func @transform_10(%arg0: i32) -> (i32, i32, i32) {
    %c0_i32 = arith.constant 0 : i32
    %c0_i32_0 = arith.constant 0 : i32
    %c0_i32_1 = arith.constant 0 : i32
    %c0_i32_2 = arith.constant 0 : i32
    return %c0_i32, %c0_i32_0, %c0_i32_1 : i32, i32, i32
  }
  func.func @transform_11(%arg0: i32) -> (i32, i32, i32) {
    %c0_i32 = arith.constant 0 : i32
    %c0_i32_0 = arith.constant 0 : i32
    %c0_i32_1 = arith.constant 0 : i32
    %c0_i32_2 = arith.constant 0 : i32
    return %c0_i32, %c0_i32_0, %c0_i32_1 : i32, i32, i32
  }
  func.func @transform_12(%arg0: i32) -> (i32, i32) {
    %c0_i32 = arith.constant 0 : i32
    %c0_i32_0 = arith.constant 0 : i32
    %c0_i32_1 = arith.constant 0 : i32
    return %c0_i32, %c0_i32_0 : i32, i32
  }
  func.func @transform_13(%arg0: i32) -> (i32, i32) {
    %c0_i32 = arith.constant 0 : i32
    %c0_i32_0 = arith.constant 0 : i32
    %c0_i32_1 = arith.constant 0 : i32
    return %c0_i32, %c0_i32_0 : i32, i32
  }
  func.func @transform_14(%arg0: i32) -> (i32, i32, i32) {
    %c0_i32 = arith.constant 0 : i32
    %c0_i32_0 = arith.constant 0 : i32
    %c0_i32_1 = arith.constant 0 : i32
    return %arg0, %c0_i32, %c0_i32_0 : i32, i32, i32
  }
}

</mosaic_0001>

<llo_original>
// kernel: cnn_lm_forward.1
$region0: #{cnn_lm_forward.1}
  #allocation0 [shape = 'u32[]', space=smem, size = 0x4, offset = 0x4, fixed_abs, tag = 'smem constant byte address 0x4 - core index']
  #allocation1 [shape = 'u32[144,128]{1,0:T(1,128)}', space=vmem, size = 0x12000, scoped, tag = 'internal scratch']
  #allocation2 [shape = 'f32[2,12,32]{2,1,0:T(8,128)}', space=vmem, size = 0x4000, scoped, tag = 'scratch operand']
  %s0 = inlined_call_operand.vmem [shape: f32[2,8,32], index: 0, kind: input, shape index: {}]
  %s1 = inlined_call_operand.vmem [shape: f32[2,8,32], index: 1, kind: input, shape index: {}]
  %s2 = inlined_call_operand.vmem [shape: f32[2,4,32], index: 2, kind: input, shape index: {}]
  %s3 = inlined_call_operand.hbm [shape: f32[2,160,32], index: 3, kind: input, shape index: {}]
  %s4 = inlined_call_operand.hbm [shape: f32[2,1,32], index: 4, kind: input, shape index: {}]
  %s5 = inlined_call_operand.vmem [shape: f32[2,4,32], index: 5, kind: input, shape index: {}]
  %s6 = inlined_call_operand.hbm [shape: f32[2,160,32], index: 6, kind: input, shape index: {}]
  %s7 = inlined_call_operand.vmem [shape: f32[2,1,32], index: 7, kind: input, shape index: {}]
  %s8 = inlined_call_operand.vmem [shape: f32[1,64,64], index: 8, kind: input, shape index: {}]
  %s9 = inlined_call_operand.hbm [shape: f32[1,64,64], index: 9, kind: input, shape index: {}]
  %s10 = inlined_call_operand.hbm [shape: f32[1,1,64], index: 10, kind: input, shape index: {}]
  %s11 = inlined_call_operand.hbm [shape: f32[1,1,64], index: 11, kind: input, shape index: {}]
  %s12 = inlined_call_operand.vmem [shape: f32[64,32], index: 12, kind: input, shape index: {}]
  %s13 = inlined_call_operand.vmem [shape: f32[1,32], index: 13, kind: input, shape index: {}]
  %s14 = inlined_call_operand.hbm [shape: f32[2,8,32], index: 14, kind: output, shape index: {}]
  %s15 = sld [smem:[#allocation0]]
  $region90: #{cnn_lm_forward.1} parent=0
    _
  %s17 = ssub.s32 1, %s15
  %s18 = scalar_select 0, %s17, %s15
  $region1: #{cnn_lm_forward.1} parent=0
    #allocation3 [shape = 'u8[163840]{0}', space=vmem, size = 0x28000, scoped, tag = 'input window, operand 3, single buffered']
    #allocation4 [shape = 's32[1]{0}', space=sflag, size = 0x4, scoped, tag = 'scoped memory for cnn_lm_forward.1']
    #allocation5 [shape = 's32[1]{0}', space=sflag, size = 0x4, scoped, tag = 'scoped memory for cnn_lm_forward.1']
    #allocation6 [shape = 'u8[1024]{0}', space=vmem, size = 0x400, scoped, tag = 'input window, operand 4, single buffered']
    #allocation7 [shape = 's32[1]{0}', space=sflag, size = 0x4, scoped, tag = 'scoped memory for cnn_lm_forward.1']
    #allocation8 [shape = 'u8[163840]{0}', space=vmem, size = 0x28000, scoped, tag = 'input window, operand 6, single buffered']
    #allocation9 [shape = 'u8[32768]{0}', space=vmem, size = 0x8000, scoped, tag = 'input window, operand 9, single buffered']
    #allocation10 [shape = 's32[1]{0}', space=sflag, size = 0x4, scoped, tag = 'scoped memory for cnn_lm_forward.1']
    #allocation11 [shape = 'u8[512]{0}', space=vmem, size = 0x400, scoped, tag = 'input window, operand 10, single buffered']
    #allocation12 [shape = 'u8[512]{0}', space=vmem, size = 0x400, scoped, tag = 'input window, operand 11, single buffered']
    #allocation13 [shape = 's32[1]{0}', space=sflag, size = 0x4, scoped, tag = 'scoped memory for cnn_lm_forward.1']
    #allocation14 [shape = 'u8[8192]{0}', space=vmem, size = 0x2000, scoped, tag = 'output window, operand 0, single buffered']
    %19 = vsyncpa [#allocation4], 0
    %20 = vsyncpa [#allocation7], 0
    %21 = vsyncpa [#allocation10], 0
    %22 = vsyncpa [#allocation13], 0
    %23 = vsyncpa [#allocation5], 0
    // Predicated region
    $region2: #{cnn_lm_forward.1} parent=1 // pred_check
      _
    $region3: #{cnn_lm_forward.1} parent=1 // pred_check_branch
      %25 = sbr.rel (0) target = $region5
    $region4: #{cnn_lm_forward.1} parent=1 // pred_region
      _
    $region5: #{cnn_lm_forward.1} parent=1 // pred_fallthru
      _
    // Predicated region
    $region6: #{cnn_lm_forward.1} parent=1 // pred_check
      _
    $region7: #{cnn_lm_forward.1} parent=1 // pred_check_branch
      %27 = sbr.rel (0) target = $region9
    $region8: #{cnn_lm_forward.1} parent=1 // pred_region
      _
    $region9: #{cnn_lm_forward.1} parent=1 // pred_fallthru
      _
    // Predicated region
    $region10: #{cnn_lm_forward.1} parent=1 // pred_check
      _
    $region11: #{cnn_lm_forward.1} parent=1 // pred_check_branch
      %29 = sbr.rel (0) target = $region13
    $region12: #{cnn_lm_forward.1} parent=1 // pred_region
      _
    $region13: #{cnn_lm_forward.1} parent=1 // pred_fallthru
      _
    // Predicated region
    $region14: #{cnn_lm_forward.1} parent=1 // pred_check
      _
    $region15: #{cnn_lm_forward.1} parent=1 // pred_check_branch
      %31 = sbr.rel (0) target = $region17
    $region16: #{cnn_lm_forward.1} parent=1 // pred_region
      %s33 = ssub.s32 5120, 5120
      %34 = vsyncadd [#allocation4], %s33
      %s35 = sshll.u32 [#allocation3], 4
      %s36 = int_to_ptr.vmem [resolvable:$true] %s35
      %41 = dma.hbm_to_vmem [thread:$0]  %s3, 5120, %s36, [#allocation4], 128, 128, 8
    $region17: #{cnn_lm_forward.1} parent=1 // pred_fallthru
      _
    // Predicated region
    $region18: #{cnn_lm_forward.1} parent=1 // pred_check
      _
    $region19: #{cnn_lm_forward.1} parent=1 // pred_check_branch
      %43 = sbr.rel (0) target = $region21
    $region20: #{cnn_lm_forward.1} parent=1 // pred_region
      %s45 = ssub.s32 32, 32
      %46 = vsyncadd [#allocation7], %s45
      %s47 = sshll.u32 [#allocation6], 4
      %s48 = int_to_ptr.vmem [resolvable:$true] %s47
      %53 = dma.hbm_to_vmem [thread:$0]  %s4, 32, %s48, [#allocation7], 16, 16, 1
    $region21: #{cnn_lm_forward.1} parent=1 // pred_fallthru
      _
    // Predicated region
    $region22: #{cnn_lm_forward.1} parent=1 // pred_check
      _
    $region23: #{cnn_lm_forward.1} parent=1 // pred_check_branch
      %55 = sbr.rel (0) target = $region25
    $region24: #{cnn_lm_forward.1} parent=1 // pred_region
      _
    $region25: #{cnn_lm_forward.1} parent=1 // pred_fallthru
      _
    // Predicated region
    $region26: #{cnn_lm_forward.1} parent=1 // pred_check
      _
    $region27: #{cnn_lm_forward.1} parent=1 // pred_check_branch
      %57 = sbr.rel (0) target = $region29
    $region28: #{cnn_lm_forward.1} parent=1 // pred_region
      %s59 = ssub.s32 5120, 5120
      %60 = vsyncadd [#allocation7], %s59
      %s61 = sshll.u32 [#allocation8], 4
      %s62 = int_to_ptr.vmem [resolvable:$true] %s61
      %67 = dma.hbm_to_vmem [thread:$0]  %s6, 5120, %s62, [#allocation7], 128, 128, 8
    $region29: #{cnn_lm_forward.1} parent=1 // pred_fallthru
      _
    // Predicated region
    $region30: #{cnn_lm_forward.1} parent=1 // pred_check
      _
    $region31: #{cnn_lm_forward.1} parent=1 // pred_check_branch
      %69 = sbr.rel (0) target = $region33
    $region32: #{cnn_lm_forward.1} parent=1 // pred_region
      _
    $region33: #{cnn_lm_forward.1} parent=1 // pred_fallthru
      _
    // Predicated region
    $region34: #{cnn_lm_forward.1} parent=1 // pred_check
      _
    $region35: #{cnn_lm_forward.1} parent=1 // pred_check_branch
      %71 = sbr.rel (0) target = $region37
    $region36: #{cnn_lm_forward.1} parent=1 // pred_region
      _
    $region37: #{cnn_lm_forward.1} parent=1 // pred_fallthru
      _
    // Predicated region
    $region38: #{cnn_lm_forward.1} parent=1 // pred_check
      _
    $region39: #{cnn_lm_forward.1} parent=1 // pred_check_branch
      %73 = sbr.rel (0) target = $region41
    $region40: #{cnn_lm_forward.1} parent=1 // pred_region
      %s75 = ssub.s32 1024, 1024
      %76 = vsyncadd [#allocation10], %s75
      %s77 = sshll.u32 [#allocation9], 4
      %s78 = int_to_ptr.vmem [resolvable:$true] %s77
      %83 = dma.hbm_to_vmem [thread:$0]  %s9, 1024, %s78, [#allocation10], 128, 128, 8
    $region41: #{cnn_lm_forward.1} parent=1 // pred_fallthru
      _
    // Predicated region
    $region42: #{cnn_lm_forward.1} parent=1 // pred_check
      _
    $region43: #{cnn_lm_forward.1} parent=1 // pred_check_branch
      %85 = sbr.rel (0) target = $region45
    $region44: #{cnn_lm_forward.1} parent=1 // pred_region
      %s87 = ssub.s32 16, 16
      %88 = vsyncadd [#allocation10], %s87
      %s90 = sshll.u32 [#allocation11], 4
      %s91 = int_to_ptr.vmem [resolvable:$true] %s90
      %93 = dma.hbm_to_vmem [thread:$0]  %s10, 16, %s91, [#allocation10]
    $region45: #{cnn_lm_forward.1} parent=1 // pred_fallthru
      _
    // Predicated region
    $region46: #{cnn_lm_forward.1} parent=1 // pred_check
      _
    $region47: #{cnn_lm_forward.1} parent=1 // pred_check_branch
      %95 = sbr.rel (0) target = $region49
    $region48: #{cnn_lm_forward.1} parent=1 // pred_region
      %s97 = ssub.s32 16, 16
      %98 = vsyncadd [#allocation13], %s97
      %s100 = sshll.u32 [#allocation12], 4
      %s101 = int_to_ptr.vmem [resolvable:$true] %s100
      %103 = dma.hbm_to_vmem [thread:$0]  %s11, 16, %s101, [#allocation13]
    $region49: #{cnn_lm_forward.1} parent=1 // pred_fallthru
      _
    // Predicated region
    $region50: #{cnn_lm_forward.1} parent=1 // pred_check
      _
    $region51: #{cnn_lm_forward.1} parent=1 // pred_check_branch
      %105 = sbr.rel (0) target = $region53
    $region52: #{cnn_lm_forward.1} parent=1 // pred_region
      _
    $region53: #{cnn_lm_forward.1} parent=1 // pred_fallthru
      _
    // Predicated region
    $region54: #{cnn_lm_forward.1} parent=1 // pred_check
      _
    $region55: #{cnn_lm_forward.1} parent=1 // pred_check_branch
      %107 = sbr.rel (0) target = $region57
    $region56: #{cnn_lm_forward.1} parent=1 // pred_region
      _
    $region57: #{cnn_lm_forward.1} parent=1 // pred_fallthru
      _
    // Predicated region
    $region58: #{cnn_lm_forward.1} parent=1 // pred_check
      _
    $region59: #{cnn_lm_forward.1} parent=1 // pred_check_branch
      %109 = sbr.rel (0) target = $region61
    $region60: #{cnn_lm_forward.1} parent=1 // pred_region
      %110 = dma.done [#allocation4], 5120
    $region61: #{cnn_lm_forward.1} parent=1 // pred_fallthru
      _
    // Predicated region
    $region62: #{cnn_lm_forward.1} parent=1 // pred_check
      _
    $region63: #{cnn_lm_forward.1} parent=1 // pred_check_branch
      %112 = sbr.rel (0) target = $region65
    $region64: #{cnn_lm_forward.1} parent=1 // pred_region
      %113 = dma.done [#allocation7], 32
    $region65: #{cnn_lm_forward.1} parent=1 // pred_fallthru
      _
    // Predicated region
    $region66: #{cnn_lm_forward.1} parent=1 // pred_check
      _
    $region67: #{cnn_lm_forward.1} parent=1 // pred_check_branch
      %115 = sbr.rel (0) target = $region69
    $region68: #{cnn_lm_forward.1} parent=1 // pred_region
      %116 = dma.done [#allocation7], 5120
    $region69: #{cnn_lm_forward.1} parent=1 // pred_fallthru
      _
    // Predicated region
    $region70: #{cnn_lm_forward.1} parent=1 // pred_check
      _
    $region71: #{cnn_lm_forward.1} parent=1 // pred_check_branch
      %118 = sbr.rel (0) target = $region73
    $region72: #{cnn_lm_forward.1} parent=1 // pred_region
      %119 = dma.done [#allocation10], 1024
    $region73: #{cnn_lm_forward.1} parent=1 // pred_fallthru
      _
    // Predicated region
    $region74: #{cnn_lm_forward.1} parent=1 // pred_check
      _
    $region75: #{cnn_lm_forward.1} parent=1 // pred_check_branch
      %121 = sbr.rel (0) target = $region77
    $region76: #{cnn_lm_forward.1} parent=1 // pred_region
      %122 = dma.done [#allocation10], 16
    $region77: #{cnn_lm_forward.1} parent=1 // pred_fallthru
      _
    // Predicated region
    $region78: #{cnn_lm_forward.1} parent=1 // pred_check
      _
    $region79: #{cnn_lm_forward.1} parent=1 // pred_check_branch
      %124 = sbr.rel (0) target = $region81
    $region80: #{cnn_lm_forward.1} parent=1 // pred_region
      %125 = dma.done [#allocation13], 16
    $region81: #{cnn_lm_forward.1} parent=1 // pred_fallthru
      _
    %v126 = vld [vmem:[%s0] sm:$0xff]
    %v127 = vld [vmem:[%s0 + $0x8] sm:$0xff]
    %v128 = vld [vmem:[%s1] sm:$0xff]
    %v129 = vld [vmem:[%s1 + $0x8] sm:$0xff]
    %v130 = vld [vmem:[%s2] sm:$0xf]
    %v131 = vld [vmem:[#allocation3] sm:$0xff]
    %v132 = vld [vmem:[#allocation3 + $0x8] sm:$0xff]
    %v133 = vld [vmem:[#allocation3 + $0x10] sm:$0xff]
    %v134 = vld [vmem:[#allocation3 + $0x18] sm:$0xff]
    %v135 = vld [vmem:[#allocation3 + $0x20] sm:$0xff]
    %v136 = vld [vmem:[#allocation3 + $0x28] sm:$0xff]
    %v137 = vld [vmem:[#allocation3 + $0x30] sm:$0xff]
    %v138 = vld [vmem:[#allocation3 + $0x38] sm:$0xff]
    %v139 = vld [vmem:[#allocation3 + $0x40] sm:$0xff]
    %v140 = vld [vmem:[#allocation3 + $0x48] sm:$0xff]
    %v141 = vld [vmem:[#allocation3 + $0x50] sm:$0xff]
    %v142 = vld [vmem:[#allocation3 + $0x58] sm:$0xff]
    %v143 = vld [vmem:[#allocation3 + $0x60] sm:$0xff]
    %v144 = vld [vmem:[#allocation3 + $0x68] sm:$0xff]
    %v145 = vld [vmem:[#allocation3 + $0x70] sm:$0xff]
    %v146 = vld [vmem:[#allocation3 + $0x78] sm:$0xff]
    %v147 = vld [vmem:[#allocation3 + $0x80] sm:$0xff]
    %v148 = vld [vmem:[#allocation3 + $0x88] sm:$0xff]
    %v149 = vld [vmem:[#allocation3 + $0x90] sm:$0xff]
    %v150 = vld [vmem:[#allocation3 + $0x98] sm:$0xff]
    %v151 = vld [vmem:[#allocation6] sm:$0x1]
    %vm152 = vcmask 257024
    %153 = vst.msk [vmem:[#allocation2] sm:$0xf] %vm152, %v130
    %154 = vst.msk [vmem:[#allocation2 + $0x10] sm:$0xf] %vm152, %v130
    %vm155 = vcmask 261120
    %156 = vst.msk [vmem:[#allocation2 + $0x4] sm:$0xff] %vm155, %v126
    %157 = vst.msk [vmem:[#allocation2 + $0x14] sm:$0xff] %vm155, %v127
    %v158 = vld [vmem:[#allocation2] sm:$0xff]
    %v159 = vld [vmem:[#allocation2 + $0x8] sm:$0xf]
    %v160 = vld [vmem:[#allocation2 + $0x10] sm:$0xff]
    %v161 = vld [vmem:[#allocation2 + $0x18] sm:$0xf]
    %vm166 = vcmask 1046528
    %v167 = vrot.slane %v158, 1
    %v168 = vrot.slane %v159, 1
    %v169 = vsel %vm166, %v167, %v168
    %v170 = vrot.slane %v160, 1
    %v171 = vrot.slane %v161, 1
    %v172 = vsel %vm166, %v170, %v171
    %173 = vrot.lane.b32.xlu0 %v169, 32
    %v174 = vpop.permute.xlu0 %173
    %175 = vrot.lane.b32.xlu0 %v172, 32
    %v176 = vpop.permute.xlu0 %175
    %vm179 = vcmask 1045504
    %v180 = vrot.slane %v158, 2
    %v181 = vrot.slane %v159, 2
    %v182 = vsel %vm179, %v180, %v181
    %v183 = vrot.slane %v160, 2
    %v184 = vrot.slane %v161, 2
    %v185 = vsel %vm179, %v183, %v184
    %186 = vrot.lane.b32.xlu0 %v182, 64
    %v187 = vpop.permute.xlu0 %186
    %188 = vrot.lane.b32.xlu0 %v185, 64
    %v189 = vpop.permute.xlu0 %188
    %vm192 = vcmask 1044480
    %v193 = vrot.slane %v158, 3
    %v194 = vrot.slane %v159, 3
    %v195 = vsel %vm192, %v193, %v194
    %v196 = vrot.slane %v160, 3
    %v197 = vrot.slane %v161, 3
    %v198 = vsel %vm192, %v196, %v197
    %199 = vrot.lane.b32.xlu0 %v195, 96
    %v200 = vpop.permute.xlu0 %199
    %201 = vrot.lane.b32.xlu0 %v198, 96
    %v202 = vpop.permute.xlu0 %201
    %vm205 = vcmask 1043456
    %v206 = vrot.slane %v158, 4
    %v207 = vrot.slane %v159, 4
    %v208 = vsel %vm205, %v206, %v207
    %v209 = vrot.slane %v160, 4
    %v210 = vrot.slane %v161, 4
    %v211 = vsel %vm205, %v209, %v210
    %v212 = vsel %vm155, %v158, %v174
    %v213 = vsel %vm155, %v160, %v176
    %vm214 = vcmask 523264
    %v215 = vsel %vm214, %v212, %v187
    %v216 = vsel %vm214, %v213, %v189
    %vm217 = vcmask 785408
    %v218 = vsel %vm217, %v215, %v200
    %v219 = vsel %vm217, %v216, %v202
    %v221 = vlaneseq
    %v222 = vshrl.u32 %v221, 7
    %v223 = vsub.s32 0, %v222
    %v224 = vrot.slane %v151, %v223
    %v226 = vsel %vm155, %v208, 0
    %v228 = vsel %vm155, %v211, 0
    %230 = vmatprep.subr.mxu0 0.0
    %231 = vmatpush1.msra.mxu0 %v146
    %232 = vmatprep.subr.mxu0 0.0
    %233 = vmatpush1.msra.mxu0 %v145
    %234 = vmatprep.subr.mxu0 0.0
    %235 = vmatpush1.msra.mxu0 %v144
    %236 = vmatprep.subr.mxu0 0.0
    %237 = vmatpush1.msra.mxu0 %v143
    %238 = vmatprep.subr.mxu0 0.0
    %239 = vmatpush1.msra.mxu0 %v142
    %240 = vmatprep.subr.mxu0 0.0
    %241 = vmatpush1.msra.mxu0 %v141
    %242 = vmatprep.subr.mxu0 0.0
    %243 = vmatpush1.msra.mxu0 %v140
    %244 = vmatprep.subr.mxu0 0.0
    %245 = vmatpush1.msra.mxu0 %v139
    %246 = vmatprep.subr.mxu0 0.0
    %247 = vmatpush1.msra.mxu0 %v138
    %248 = vmatprep.subr.mxu0 0.0
    %249 = vmatpush1.msra.mxu0 %v137
    %250 = vmatprep.subr.mxu0 0.0
    %251 = vmatpush1.msra.mxu0 %v136
    %252 = vmatprep.subr.mxu0 0.0
    %253 = vmatpush1.msra.mxu0 %v135
    %254 = vmatprep.subr.mxu0 0.0
    %255 = vmatpush1.msra.mxu0 %v134
    %256 = vmatprep.subr.mxu0 0.0
    %257 = vmatpush1.msra.mxu0 %v133
    %258 = vmatprep.subr.mxu0 0.0
    %259 = vmatpush1.msra.mxu0 %v132
    %260 = vmatprep.subr.mxu0 0.0
    %261 = vmatpush1.msra.mxu0 %v131
    %262 = vmatprep.subr.mxu0 0.0
    %263 = vmatpush2.msra.mxu0 0.0
    %264 = vmatprep.subr.mxu0 0.0
    %265 = vmatpush2.msra.mxu0 0.0
    %266 = vmatprep.subr.mxu0 0.0
    %267 = vmatpush2.msra.mxu0 0.0
    %268 = vmatprep.subr.mxu0 0.0
    %269 = vmatpush2.msra.mxu0 0.0
    %270 = vmatprep.subr.mxu0 0.0
    %271 = vmatpush2.msra.mxu0 0.0
    %272 = vmatprep.subr.mxu0 0.0
    %273 = vmatpush2.msra.mxu0 0.0
    %274 = vmatprep.subr.mxu0 0.0
    %275 = vmatpush2.msra.mxu0 0.0
    %276 = vmatprep.subr.mxu0 0.0
    %277 = vmatpush2.msra.mxu0 0.0
    %278 = vmatprep.subr.mxu0 0.0
    %279 = vmatpush2.msra.mxu0 0.0
    %280 = vmatprep.subr.mxu0 0.0
    %281 = vmatpush2.msra.mxu0 0.0
    %282 = vmatprep.subr.mxu0 0.0
    %283 = vmatpush2.msra.mxu0 0.0
    %284 = vmatprep.subr.mxu0 0.0
    %285 = vmatpush2.msra.mxu0 0.0
    %286 = vmatprep.subr.mxu0 0.0
    %287 = vmatpush2.msra.mxu0 %v150
    %288 = vmatprep.subr.mxu0 0.0
    %289 = vmatpush2.msra.mxu0 %v149
    %290 = vmatprep.subr.mxu0 0.0
    %291 = vmatpush2.msra.mxu0 %v148
    %292 = vmatprep.subr.mxu0 0.0
    %293 = vmatpush2.msra.mxu0 %v147
    %294 = vmatprep.mubr.f32.mxu0 %v226
    %295 = vmatmul.mubr.f32.gmra.mxu0 %v218
    %v296 = vpop.f32.mrf.mxu0
    %v297 = vadd.f32 %v224, %v296
    %v298 = vpop.f32.mrf.mxu0
    %299 = vmatprep.mubr.f32.mxu0 %v228
    %300 = vmatmul.mubr.f32.gmra.mxu0 %v219
    %v301 = vpop.f32.mrf.mxu0
    %v302 = vadd.f32 %v224, %v301
    %v303 = vpop.f32.mrf.mxu0
    %304 = vdwg.mxu0
    %v305 = vmax.f32 %v297, 0.0
    %v306 = vmax.f32 %v302, 0.0
    %v307 = vld [vmem:[%s5] sm:$0xf]
    %v308 = vld [vmem:[#allocation8] sm:$0xff]
    %v309 = vld [vmem:[#allocation8 + $0x8] sm:$0xff]
    %v310 = vld [vmem:[#allocation8 + $0x10] sm:$0xff]
    %v311 = vld [vmem:[#allocation8 + $0x18] sm:$0xff]
    %v312 = vld [vmem:[#allocation8 + $0x20] sm:$0xff]
    %v313 = vld [vmem:[#allocation8 + $0x28] sm:$0xff]
    %v314 = vld [vmem:[#allocation8 + $0x30] sm:$0xff]
    %v315 = vld [vmem:[#allocation8 + $0x38] sm:$0xff]
    %v316 = vld [vmem:[#allocation8 + $0x40] sm:$0xff]
    %v317 = vld [vmem:[#allocation8 + $0x48] sm:$0xff]
    %v318 = vld [vmem:[#allocation8 + $0x50] sm:$0xff]
    %v319 = vld [vmem:[#allocation8 + $0x58] sm:$0xff]
    %v320 = vld [vmem:[#allocation8 + $0x60] sm:$0xff]
    %v321 = vld [vmem:[#allocation8 + $0x68] sm:$0xff]
    %v322 = vld [vmem:[#allocation8 + $0x70] sm:$0xff]
    %v323 = vld [vmem:[#allocation8 + $0x78] sm:$0xff]
    %v324 = vld [vmem:[#allocation8 + $0x80] sm:$0xff]
    %v325 = vld [vmem:[#allocation8 + $0x88] sm:$0xff]
    %v326 = vld [vmem:[#allocation8 + $0x90] sm:$0xff]
    %v327 = vld [vmem:[#allocation8 + $0x98] sm:$0xff]
    %v328 = vld [vmem:[%s7] sm:$0x1]
    %329 = vst.msk [vmem:[#allocation2] sm:$0xf] %vm152, %v307
    %330 = vst.msk [vmem:[#allocation2 + $0x10] sm:$0xf] %vm152, %v307
    %331 = vst.msk [vmem:[#allocation2 + $0x4] sm:$0xff] %vm155, %v128
    %332 = vst.msk [vmem:[#allocation2 + $0x14] sm:$0xff] %vm155, %v129
    %v333 = vld [vmem:[#allocation2] sm:$0xff]
    %v334 = vld [vmem:[#allocation2 + $0x8] sm:$0xf]
    %v335 = vld [vmem:[#allocation2 + $0x10] sm:$0xff]
    %v336 = vld [vmem:[#allocation2 + $0x18] sm:$0xf]
    %v341 = vrot.slane %v333, 1
    %v342 = vrot.slane %v334, 1
    %v343 = vsel %vm166, %v341, %v342
    %v344 = vrot.slane %v335, 1
    %v345 = vrot.slane %v336, 1
    %v346 = vsel %vm166, %v344, %v345
    %347 = vrot.lane.b32.xlu0 %v343, 32
    %v348 = vpop.permute.xlu0 %347
    %349 = vrot.lane.b32.xlu0 %v346, 32
    %v350 = vpop.permute.xlu0 %349
    %v353 = vrot.slane %v333, 2
    %v354 = vrot.slane %v334, 2
    %v355 = vsel %vm179, %v353, %v354
    %v356 = vrot.slane %v335, 2
    %v357 = vrot.slane %v336, 2
    %v358 = vsel %vm179, %v356, %v357
    %359 = vrot.lane.b32.xlu0 %v355, 64
    %v360 = vpop.permute.xlu0 %359
    %361 = vrot.lane.b32.xlu0 %v358, 64
    %v362 = vpop.permute.xlu0 %361
    %v365 = vrot.slane %v333, 3
    %v366 = vrot.slane %v334, 3
    %v367 = vsel %vm192, %v365, %v366
    %v368 = vrot.slane %v335, 3
    %v369 = vrot.slane %v336, 3
    %v370 = vsel %vm192, %v368, %v369
    %371 = vrot.lane.b32.xlu0 %v367, 96
    %v372 = vpop.permute.xlu0 %371
    %373 = vrot.lane.b32.xlu0 %v370, 96
    %v374 = vpop.permute.xlu0 %373
    %v377 = vrot.slane %v333, 4
    %v378 = vrot.slane %v334, 4
    %v379 = vsel %vm205, %v377, %v378
    %v380 = vrot.slane %v335, 4
    %v381 = vrot.slane %v336, 4
    %v382 = vsel %vm205, %v380, %v381
    %v383 = vsel %vm155, %v333, %v348
    %v384 = vsel %vm155, %v335, %v350
    %v385 = vsel %vm214, %v383, %v360
    %v386 = vsel %vm214, %v384, %v362
    %v387 = vsel %vm217, %v385, %v372
    %v388 = vsel %vm217, %v386, %v374
    %v390 = vlaneseq
    %v391 = vshrl.u32 %v390, 7
    %v392 = vsub.s32 0, %v391
    %v393 = vrot.slane %v328, %v392
    %v395 = vsel %vm155, %v379, 0
    %v397 = vsel %vm155, %v382, 0
    %399 = vmatprep.subr.mxu0 0.0
    %400 = vmatpush1.msra.mxu0 %v323
    %401 = vmatprep.subr.mxu0 0.0
    %402 = vmatpush1.msra.mxu0 %v322
    %403 = vmatprep.subr.mxu0 0.0
    %404 = vmatpush1.msra.mxu0 %v321
    %405 = vmatprep.subr.mxu0 0.0
    %406 = vmatpush1.msra.mxu0 %v320
    %407 = vmatprep.subr.mxu0 0.0
    %408 = vmatpush1.msra.mxu0 %v319
    %409 = vmatprep.subr.mxu0 0.0
    %410 = vmatpush1.msra.mxu0 %v318
    %411 = vmatprep.subr.mxu0 0.0
    %412 = vmatpush1.msra.mxu0 %v317
    %413 = vmatprep.subr.mxu0 0.0
    %414 = vmatpush1.msra.mxu0 %v316
    %415 = vmatprep.subr.mxu0 0.0
    %416 = vmatpush1.msra.mxu0 %v315
    %417 = vmatprep.subr.mxu0 0.0
    %418 = vmatpush1.msra.mxu0 %v314
    %419 = vmatprep.subr.mxu0 0.0
    %420 = vmatpush1.msra.mxu0 %v313
    %421 = vmatprep.subr.mxu0 0.0
    %422 = vmatpush1.msra.mxu0 %v312
    %423 = vmatprep.subr.mxu0 0.0
    %424 = vmatpush1.msra.mxu0 %v311
    %425 = vmatprep.subr.mxu0 0.0
    %426 = vmatpush1.msra.mxu0 %v310
    %427 = vmatprep.subr.mxu0 0.0
    %428 = vmatpush1.msra.mxu0 %v309
    %429 = vmatprep.subr.mxu0 0.0
    %430 = vmatpush1.msra.mxu0 %v308
    %431 = vmatprep.subr.mxu0 0.0
    %432 = vmatpush2.msra.mxu0 0.0
    %433 = vmatprep.subr.mxu0 0.0
    %434 = vmatpush2.msra.mxu0 0.0
    %435 = vmatprep.subr.mxu0 0.0
    %436 = vmatpush2.msra.mxu0 0.0
    %437 = vmatprep.subr.mxu0 0.0
    %438 = vmatpush2.msra.mxu0 0.0
    %439 = vmatprep.subr.mxu0 0.0
    %440 = vmatpush2.msra.mxu0 0.0
    %441 = vmatprep.subr.mxu0 0.0
    %442 = vmatpush2.msra.mxu0 0.0
    %443 = vmatprep.subr.mxu0 0.0
    %444 = vmatpush2.msra.mxu0 0.0
    %445 = vmatprep.subr.mxu0 0.0
    %446 = vmatpush2.msra.mxu0 0.0
    %447 = vmatprep.subr.mxu0 0.0
    %448 = vmatpush2.msra.mxu0 0.0
    %449 = vmatprep.subr.mxu0 0.0
    %450 = vmatpush2.msra.mxu0 0.0
    %451 = vmatprep.subr.mxu0 0.0
    %452 = vmatpush2.msra.mxu0 0.0
    %453 = vmatprep.subr.mxu0 0.0
    %454 = vmatpush2.msra.mxu0 0.0
    %455 = vmatprep.subr.mxu0 0.0
    %456 = vmatpush2.msra.mxu0 %v327
    %457 = vmatprep.subr.mxu0 0.0
    %458 = vmatpush2.msra.mxu0 %v326
    %459 = vmatprep.subr.mxu0 0.0
    %460 = vmatpush2.msra.mxu0 %v325
    %461 = vmatprep.subr.mxu0 0.0
    %462 = vmatpush2.msra.mxu0 %v324
    %463 = vmatprep.mubr.f32.mxu0 %v395
    %464 = vmatmul.mubr.f32.gmra.mxu0 %v387
    %v465 = vpop.f32.mrf.mxu0
    %v466 = vadd.f32 %v393, %v465
    %v467 = vpop.f32.mrf.mxu0
    %468 = vmatprep.mubr.f32.mxu0 %v397
    %469 = vmatmul.mubr.f32.gmra.mxu0 %v388
    %v470 = vpop.f32.mrf.mxu0
    %v471 = vadd.f32 %v393, %v470
    %v472 = vpop.f32.mrf.mxu0
    %473 = vdwg.mxu0
    %v474 = vmax.f32 %v466, 0.0
    %v475 = vmax.f32 %v471, 0.0
    %s476 = scalar_lea.vmem %s2, 4
    %v477 = vld [vmem:[%s476] sm:$0xf]
    %s478 = scalar_lea.vmem [#allocation3], 160
    %v479 = vld [vmem:[%s478] sm:$0xff]
    %v480 = vld [vmem:[%s478 + $0x8] sm:$0xff]
    %v481 = vld [vmem:[%s478 + $0x10] sm:$0xff]
    %v482 = vld [vmem:[%s478 + $0x18] sm:$0xff]
    %v483 = vld [vmem:[%s478 + $0x20] sm:$0xff]
    %v484 = vld [vmem:[%s478 + $0x28] sm:$0xff]
    %v485 = vld [vmem:[%s478 + $0x30] sm:$0xff]
    %v486 = vld [vmem:[%s478 + $0x38] sm:$0xff]
    %v487 = vld [vmem:[%s478 + $0x40] sm:$0xff]
    %v488 = vld [vmem:[%s478 + $0x48] sm:$0xff]
    %v489 = vld [vmem:[%s478 + $0x50] sm:$0xff]
    %v490 = vld [vmem:[%s478 + $0x58] sm:$0xff]
    %v491 = vld [vmem:[%s478 + $0x60] sm:$0xff]
    %v492 = vld [vmem:[%s478 + $0x68] sm:$0xff]
    %v493 = vld [vmem:[%s478 + $0x70] sm:$0xff]
    %v494 = vld [vmem:[%s478 + $0x78] sm:$0xff]
    %v495 = vld [vmem:[%s478 + $0x80] sm:$0xff]
    %v496 = vld [vmem:[%s478 + $0x88] sm:$0xff]
    %v497 = vld [vmem:[%s478 + $0x90] sm:$0xff]
    %v498 = vld [vmem:[%s478 + $0x98] sm:$0xff]
    %s499 = scalar_lea.vmem [#allocation6], 1
    %v500 = vld [vmem:[%s499] sm:$0x1]
    %501 = vst.msk [vmem:[#allocation2] sm:$0xf] %vm152, %v477
    %502 = vst.msk [vmem:[#allocation2 + $0x10] sm:$0xf] %vm152, %v477
    %503 = vst.msk [vmem:[#allocation2 + $0x4] sm:$0xff] %vm155, %v305
    %504 = vst.msk [vmem:[#allocation2 + $0x14] sm:$0xff] %vm155, %v306
    %v505 = vld [vmem:[#allocation2] sm:$0xff]
    %v506 = vld [vmem:[#allocation2 + $0x8] sm:$0xf]
    %v507 = vld [vmem:[#allocation2 + $0x10] sm:$0xff]
    %v508 = vld [vmem:[#allocation2 + $0x18] sm:$0xf]
    %v513 = vrot.slane %v505, 1
    %v514 = vrot.slane %v506, 1
    %v515 = vsel %vm166, %v513, %v514
    %v516 = vrot.slane %v507, 1
    %v517 = vrot.slane %v508, 1
    %v518 = vsel %vm166, %v516, %v517
    %519 = vrot.lane.b32.xlu0 %v515, 32
    %v520 = vpop.permute.xlu0 %519
    %521 = vrot.lane.b32.xlu0 %v518, 32
    %v522 = vpop.permute.xlu0 %521
    %v525 = vrot.slane %v505, 2
    %v526 = vrot.slane %v506, 2
    %v527 = vsel %vm179, %v525, %v526
    %v528 = vrot.slane %v507, 2
    %v529 = vrot.slane %v508, 2
    %v530 = vsel %vm179, %v528, %v529
    %531 = vrot.lane.b32.xlu0 %v527, 64
    %v532 = vpop.permute.xlu0 %531
    %533 = vrot.lane.b32.xlu0 %v530, 64
    %v534 = vpop.permute.xlu0 %533
    %v537 = vrot.slane %v505, 3
    %v538 = vrot.slane %v506, 3
    %v539 = vsel %vm192, %v537, %v538
    %v540 = vrot.slane %v507, 3
    %v541 = vrot.slane %v508, 3
    %v542 = vsel %vm192, %v540, %v541
    %543 = vrot.lane.b32.xlu0 %v539, 96
    %v544 = vpop.permute.xlu0 %543
    %545 = vrot.lane.b32.xlu0 %v542, 96
    %v546 = vpop.permute.xlu0 %545
    %v549 = vrot.slane %v505, 4
    %v550 = vrot.slane %v506, 4
    %v551 = vsel %vm205, %v549, %v550
    %v552 = vrot.slane %v507, 4
    %v553 = vrot.slane %v508, 4
    %v554 = vsel %vm205, %v552, %v553
    %v555 = vsel %vm155, %v505, %v520
    %v556 = vsel %vm155, %v507, %v522
    %v557 = vsel %vm214, %v555, %v532
    %v558 = vsel %vm214, %v556, %v534
    %v559 = vsel %vm217, %v557, %v544
    %v560 = vsel %vm217, %v558, %v546
    %v562 = vlaneseq
    %v563 = vshrl.u32 %v562, 7
    %v564 = vsub.s32 0, %v563
    %v565 = vrot.slane %v500, %v564
    %v567 = vsel %vm155, %v551, 0
    %v569 = vsel %vm155, %v554, 0
    %571 = vmatprep.subr.mxu0 0.0
    %572 = vmatpush1.msra.mxu0 %v494
    %573 = vmatprep.subr.mxu0 0.0
    %574 = vmatpush1.msra.mxu0 %v493
    %575 = vmatprep.subr.mxu0 0.0
    %576 = vmatpush1.msra.mxu0 %v492
    %577 = vmatprep.subr.mxu0 0.0
    %578 = vmatpush1.msra.mxu0 %v491
    %579 = vmatprep.subr.mxu0 0.0
    %580 = vmatpush1.msra.mxu0 %v490
    %581 = vmatprep.subr.mxu0 0.0
    %582 = vmatpush1.msra.mxu0 %v489
    %583 = vmatprep.subr.mxu0 0.0
    %584 = vmatpush1.msra.mxu0 %v488
    %585 = vmatprep.subr.mxu0 0.0
    %586 = vmatpush1.msra.mxu0 %v487
    %587 = vmatprep.subr.mxu0 0.0
    %588 = vmatpush1.msra.mxu0 %v486
    %589 = vmatprep.subr.mxu0 0.0
    %590 = vmatpush1.msra.mxu0 %v485
    %591 = vmatprep.subr.mxu0 0.0
    %592 = vmatpush1.msra.mxu0 %v484
    %593 = vmatprep.subr.mxu0 0.0
    %594 = vmatpush1.msra.mxu0 %v483
    %595 = vmatprep.subr.mxu0 0.0
    %596 = vmatpush1.msra.mxu0 %v482
    %597 = vmatprep.subr.mxu0 0.0
    %598 = vmatpush1.msra.mxu0 %v481
    %599 = vmatprep.subr.mxu0 0.0
    %600 = vmatpush1.msra.mxu0 %v480
    %601 = vmatprep.subr.mxu0 0.0
    %602 = vmatpush1.msra.mxu0 %v479
    %603 = vmatprep.subr.mxu0 0.0
    %604 = vmatpush2.msra.mxu0 0.0
    %605 = vmatprep.subr.mxu0 0.0
    %606 = vmatpush2.msra.mxu0 0.0
    %607 = vmatprep.subr.mxu0 0.0
    %608 = vmatpush2.msra.mxu0 0.0
    %609 = vmatprep.subr.mxu0 0.0
    %610 = vmatpush2.msra.mxu0 0.0
    %611 = vmatprep.subr.mxu0 0.0
    %612 = vmatpush2.msra.mxu0 0.0
    %613 = vmatprep.subr.mxu0 0.0
    %614 = vmatpush2.msra.mxu0 0.0
    %615 = vmatprep.subr.mxu0 0.0
    %616 = vmatpush2.msra.mxu0 0.0
    %617 = vmatprep.subr.mxu0 0.0
    %618 = vmatpush2.msra.mxu0 0.0
    %619 = vmatprep.subr.mxu0 0.0
    %620 = vmatpush2.msra.mxu0 0.0
    %621 = vmatprep.subr.mxu0 0.0
    %622 = vmatpush2.msra.mxu0 0.0
    %623 = vmatprep.subr.mxu0 0.0
    %624 = vmatpush2.msra.mxu0 0.0
    %625 = vmatprep.subr.mxu0 0.0
    %626 = vmatpush2.msra.mxu0 0.0
    %627 = vmatprep.subr.mxu0 0.0
    %628 = vmatpush2.msra.mxu0 %v498
    %629 = vmatprep.subr.mxu0 0.0
    %630 = vmatpush2.msra.mxu0 %v497
    %631 = vmatprep.subr.mxu0 0.0
    %632 = vmatpush2.msra.mxu0 %v496
    %633 = vmatprep.subr.mxu0 0.0
    %634 = vmatpush2.msra.mxu0 %v495
    %635 = vmatprep.mubr.f32.mxu0 %v567
    %636 = vmatmul.mubr.f32.gmra.mxu0 %v559
    %v637 = vpop.f32.mrf.mxu0
    %v638 = vadd.f32 %v565, %v637
    %v639 = vpop.f32.mrf.mxu0
    %640 = vmatprep.mubr.f32.mxu0 %v569
    %641 = vmatmul.mubr.f32.gmra.mxu0 %v560
    %v642 = vpop.f32.mrf.mxu0
    %v643 = vadd.f32 %v565, %v642
    %v644 = vpop.f32.mrf.mxu0
    %645 = vdwg.mxu0
    %v646 = vmax.f32 %v638, 0.0
    %v647 = vmax.f32 %v643, 0.0
    %s648 = scalar_lea.vmem %s5, 4
    %v649 = vld [vmem:[%s648] sm:$0xf]
    %s650 = scalar_lea.vmem [#allocation8], 160
    %v651 = vld [vmem:[%s650] sm:$0xff]
    %v652 = vld [vmem:[%s650 + $0x8] sm:$0xff]
    %v653 = vld [vmem:[%s650 + $0x10] sm:$0xff]
    %v654 = vld [vmem:[%s650 + $0x18] sm:$0xff]
    %v655 = vld [vmem:[%s650 + $0x20] sm:$0xff]
    %v656 = vld [vmem:[%s650 + $0x28] sm:$0xff]
    %v657 = vld [vmem:[%s650 + $0x30] sm:$0xff]
    %v658 = vld [vmem:[%s650 + $0x38] sm:$0xff]
    %v659 = vld [vmem:[%s650 + $0x40] sm:$0xff]
    %v660 = vld [vmem:[%s650 + $0x48] sm:$0xff]
    %v661 = vld [vmem:[%s650 + $0x50] sm:$0xff]
    %v662 = vld [vmem:[%s650 + $0x58] sm:$0xff]
    %v663 = vld [vmem:[%s650 + $0x60] sm:$0xff]
    %v664 = vld [vmem:[%s650 + $0x68] sm:$0xff]
    %v665 = vld [vmem:[%s650 + $0x70] sm:$0xff]
    %v666 = vld [vmem:[%s650 + $0x78] sm:$0xff]
    %v667 = vld [vmem:[%s650 + $0x80] sm:$0xff]
    %v668 = vld [vmem:[%s650 + $0x88] sm:$0xff]
    %v669 = vld [vmem:[%s650 + $0x90] sm:$0xff]
    %v670 = vld [vmem:[%s650 + $0x98] sm:$0xff]
    %s671 = scalar_lea.vmem %s7, 1
    %v672 = vld [vmem:[%s671] sm:$0x1]
    %673 = vst.msk [vmem:[#allocation2] sm:$0xf] %vm152, %v649
    %674 = vst.msk [vmem:[#allocation2 + $0x10] sm:$0xf] %vm152, %v649
    %675 = vst.msk [vmem:[#allocation2 + $0x4] sm:$0xff] %vm155, %v474
    %676 = vst.msk [vmem:[#allocation2 + $0x14] sm:$0xff] %vm155, %v475
    %v677 = vld [vmem:[#allocation2] sm:$0xff]
    %v678 = vld [vmem:[#allocation2 + $0x8] sm:$0xf]
    %v679 = vld [vmem:[#allocation2 + $0x10] sm:$0xff]
    %v680 = vld [vmem:[#allocation2 + $0x18] sm:$0xf]
    %v685 = vrot.slane %v677, 1
    %v686 = vrot.slane %v678, 1
    %v687 = vsel %vm166, %v685, %v686
    %v688 = vrot.slane %v679, 1
    %v689 = vrot.slane %v680, 1
    %v690 = vsel %vm166, %v688, %v689
    %691 = vrot.lane.b32.xlu0 %v687, 32
    %v692 = vpop.permute.xlu0 %691
    %693 = vrot.lane.b32.xlu0 %v690, 32
    %v694 = vpop.permute.xlu0 %693
    %v697 = vrot.slane %v677, 2
    %v698 = vrot.slane %v678, 2
    %v699 = vsel %vm179, %v697, %v698
    %v700 = vrot.slane %v679, 2
    %v701 = vrot.slane %v680, 2
    %v702 = vsel %vm179, %v700, %v701
    %703 = vrot.lane.b32.xlu0 %v699, 64
    %v704 = vpop.permute.xlu0 %703
    %705 = vrot.lane.b32.xlu0 %v702, 64
    %v706 = vpop.permute.xlu0 %705
    %v709 = vrot.slane %v677, 3
    %v710 = vrot.slane %v678, 3
    %v711 = vsel %vm192, %v709, %v710
    %v712 = vrot.slane %v679, 3
    %v713 = vrot.slane %v680, 3
    %v714 = vsel %vm192, %v712, %v713
    %715 = vrot.lane.b32.xlu0 %v711, 96
    %v716 = vpop.permute.xlu0 %715
    %717 = vrot.lane.b32.xlu0 %v714, 96
    %v718 = vpop.permute.xlu0 %717
    %v721 = vrot.slane %v677, 4
    %v722 = vrot.slane %v678, 4
    %v723 = vsel %vm205, %v721, %v722
    %v724 = vrot.slane %v679, 4
    %v725 = vrot.slane %v680, 4
    %v726 = vsel %vm205, %v724, %v725
    %v727 = vsel %vm155, %v677, %v692
    %v728 = vsel %vm155, %v679, %v694
    %v729 = vsel %vm214, %v727, %v704
    %v730 = vsel %vm214, %v728, %v706
    %v731 = vsel %vm217, %v729, %v716
    %v732 = vsel %vm217, %v730, %v718
    %v734 = vlaneseq
    %v735 = vshrl.u32 %v734, 7
    %v736 = vsub.s32 0, %v735
    %v737 = vrot.slane %v672, %v736
    %v739 = vsel %vm155, %v723, 0
    %v741 = vsel %vm155, %v726, 0
    %743 = vmatprep.subr.mxu0 0.0
    %744 = vmatpush1.msra.mxu0 %v666
    %745 = vmatprep.subr.mxu0 0.0
    %746 = vmatpush1.msra.mxu0 %v665
    %747 = vmatprep.subr.mxu0 0.0
    %748 = vmatpush1.msra.mxu0 %v664
    %749 = vmatprep.subr.mxu0 0.0
    %750 = vmatpush1.msra.mxu0 %v663
    %751 = vmatprep.subr.mxu0 0.0
    %752 = vmatpush1.msra.mxu0 %v662
    %753 = vmatprep.subr.mxu0 0.0
    %754 = vmatpush1.msra.mxu0 %v661
    %755 = vmatprep.subr.mxu0 0.0
    %756 = vmatpush1.msra.mxu0 %v660
    %757 = vmatprep.subr.mxu0 0.0
    %758 = vmatpush1.msra.mxu0 %v659
    %759 = vmatprep.subr.mxu0 0.0
    %760 = vmatpush1.msra.mxu0 %v658
    %761 = vmatprep.subr.mxu0 0.0
    %762 = vmatpush1.msra.mxu0 %v657
    %763 = vmatprep.subr.mxu0 0.0
    %764 = vmatpush1.msra.mxu0 %v656
    %765 = vmatprep.subr.mxu0 0.0
    %766 = vmatpush1.msra.mxu0 %v655
    %767 = vmatprep.subr.mxu0 0.0
    %768 = vmatpush1.msra.mxu0 %v654
    %769 = vmatprep.subr.mxu0 0.0
    %770 = vmatpush1.msra.mxu0 %v653
    %771 = vmatprep.subr.mxu0 0.0
    %772 = vmatpush1.msra.mxu0 %v652
    %773 = vmatprep.subr.mxu0 0.0
    %774 = vmatpush1.msra.mxu0 %v651
    %775 = vmatprep.subr.mxu0 0.0
    %776 = vmatpush2.msra.mxu0 0.0
    %777 = vmatprep.subr.mxu0 0.0
    %778 = vmatpush2.msra.mxu0 0.0
    %779 = vmatprep.subr.mxu0 0.0
    %780 = vmatpush2.msra.mxu0 0.0
    %781 = vmatprep.subr.mxu0 0.0
    %782 = vmatpush2.msra.mxu0 0.0
    %783 = vmatprep.subr.mxu0 0.0
    %784 = vmatpush2.msra.mxu0 0.0
    %785 = vmatprep.subr.mxu0 0.0
    %786 = vmatpush2.msra.mxu0 0.0
    %787 = vmatprep.subr.mxu0 0.0
    %788 = vmatpush2.msra.mxu0 0.0
    %789 = vmatprep.subr.mxu0 0.0
    %790 = vmatpush2.msra.mxu0 0.0
    %791 = vmatprep.subr.mxu0 0.0
    %792 = vmatpush2.msra.mxu0 0.0
    %793 = vmatprep.subr.mxu0 0.0
    %794 = vmatpush2.msra.mxu0 0.0
    %795 = vmatprep.subr.mxu0 0.0
    %796 = vmatpush2.msra.mxu0 0.0
    %797 = vmatprep.subr.mxu0 0.0
    %798 = vmatpush2.msra.mxu0 0.0
    %799 = vmatprep.subr.mxu0 0.0
    %800 = vmatpush2.msra.mxu0 %v670
    %801 = vmatprep.subr.mxu0 0.0
    %802 = vmatpush2.msra.mxu0 %v669
    %803 = vmatprep.subr.mxu0 0.0
    %804 = vmatpush2.msra.mxu0 %v668
    %805 = vmatprep.subr.mxu0 0.0
    %806 = vmatpush2.msra.mxu0 %v667
    %807 = vmatprep.mubr.f32.mxu0 %v739
    %808 = vmatmul.mubr.f32.gmra.mxu0 %v731
    %v809 = vpop.f32.mrf.mxu0
    %v810 = vadd.f32 %v737, %v809
    %v811 = vpop.f32.mrf.mxu0
    %812 = vmatprep.mubr.f32.mxu0 %v741
    %813 = vmatmul.mubr.f32.gmra.mxu0 %v732
    %v814 = vpop.f32.mrf.mxu0
    %v815 = vadd.f32 %v737, %v814
    %v816 = vpop.f32.mrf.mxu0
    %817 = vdwg.mxu0
    %v818 = vmax.f32 %v810, 0.0
    %v819 = vmax.f32 %v815, 0.0
    %v820 = vlaneseq
    %v821 = vshrl.u32 %v820, 7
    %v822 = vlaneseq
    %v823 = vand.u32 %v822, 127
    %v824 = vadd.s32 %v821, %v823
    %vm825 = vcmp.eq.s32.totalorder %v824, 7
    %v826 = vsel %vm825, 1.0, 0.0
    %vm827 = vcmask 64512
    %v829 = vsel %vm827, %v826, 0
    %831 = vmatprep.subr.mxu0 0.0
    %832 = vmatpush1.msra.mxu0 0.0
    %833 = vmatprep.subr.mxu0 0.0
    %834 = vmatpush1.msra.mxu0 0.0
    %835 = vmatprep.subr.mxu0 0.0
    %836 = vmatpush1.msra.mxu0 0.0
    %837 = vmatprep.subr.mxu0 0.0
    %838 = vmatpush1.msra.mxu0 0.0
    %839 = vmatprep.subr.mxu0 0.0
    %840 = vmatpush1.msra.mxu0 0.0
    %841 = vmatprep.subr.mxu0 0.0
    %842 = vmatpush1.msra.mxu0 0.0
    %843 = vmatprep.subr.mxu0 0.0
    %844 = vmatpush1.msra.mxu0 0.0
    %845 = vmatprep.subr.mxu0 0.0
    %846 = vmatpush1.msra.mxu0 0.0
    %847 = vmatprep.subr.mxu0 0.0
    %848 = vmatpush1.msra.mxu0 0.0
    %849 = vmatprep.subr.mxu0 0.0
    %850 = vmatpush1.msra.mxu0 0.0
    %851 = vmatprep.subr.mxu0 0.0
    %852 = vmatpush1.msra.mxu0 0.0
    %853 = vmatprep.subr.mxu0 0.0
    %854 = vmatpush1.msra.mxu0 0.0
    %855 = vmatprep.subr.mxu0 0.0
    %856 = vmatpush1.msra.mxu0 0.0
    %857 = vmatprep.subr.mxu0 0.0
    %858 = vmatpush1.msra.mxu0 0.0
    %859 = vmatprep.subr.mxu0 0.0
    %860 = vmatpush1.msra.mxu0 0.0
    %861 = vmatprep.subr.mxu0 0.0
    %862 = vmatpush1.msra.mxu0 %v818
    %863 = vmatprep.subr.mxu0 0.0
    %864 = vmatpush2.msra.mxu0 0.0
    %865 = vmatprep.subr.mxu0 0.0
    %866 = vmatpush2.msra.mxu0 0.0
    %867 = vmatprep.subr.mxu0 0.0
    %868 = vmatpush2.msra.mxu0 0.0
    %869 = vmatprep.subr.mxu0 0.0
    %870 = vmatpush2.msra.mxu0 0.0
    %871 = vmatprep.subr.mxu0 0.0
    %872 = vmatpush2.msra.mxu0 0.0
    %873 = vmatprep.subr.mxu0 0.0
    %874 = vmatpush2.msra.mxu0 0.0
    %875 = vmatprep.subr.mxu0 0.0
    %876 = vmatpush2.msra.mxu0 0.0
    %877 = vmatprep.subr.mxu0 0.0
    %878 = vmatpush2.msra.mxu0 0.0
    %879 = vmatprep.subr.mxu0 0.0
    %880 = vmatpush2.msra.mxu0 0.0
    %881 = vmatprep.subr.mxu0 0.0
    %882 = vmatpush2.msra.mxu0 0.0
    %883 = vmatprep.subr.mxu0 0.0
    %884 = vmatpush2.msra.mxu0 0.0
    %885 = vmatprep.subr.mxu0 0.0
    %886 = vmatpush2.msra.mxu0 0.0
    %887 = vmatprep.subr.mxu0 0.0
    %888 = vmatpush2.msra.mxu0 0.0
    %889 = vmatprep.subr.mxu0 0.0
    %890 = vmatpush2.msra.mxu0 0.0
    %891 = vmatprep.subr.mxu0 0.0
    %892 = vmatpush2.msra.mxu0 0.0
    %893 = vmatprep.subr.mxu0 0.0
    %894 = vmatpush2.msra.mxu0 0.0
    %895 = vmatprep.mubr.f32.mxu0 0.0
    %896 = vmatmul.mubr.f32.gmra.mxu0 %v829
    %v897 = vpop.f32.mrf.mxu0
    %v898 = vadd.f32 0.0, %v897
    %v899 = vpop.f32.mrf.mxu0
    %900 = vdwg.mxu0
    %901 = vmatprep.subr.mxu0 0.0
    %902 = vmatpush1.msra.mxu0 0.0
    %903 = vmatprep.subr.mxu0 0.0
    %904 = vmatpush1.msra.mxu0 0.0
    %905 = vmatprep.subr.mxu0 0.0
    %906 = vmatpush1.msra.mxu0 0.0
    %907 = vmatprep.subr.mxu0 0.0
    %908 = vmatpush1.msra.mxu0 0.0
    %909 = vmatprep.subr.mxu0 0.0
    %910 = vmatpush1.msra.mxu0 0.0
    %911 = vmatprep.subr.mxu0 0.0
    %912 = vmatpush1.msra.mxu0 0.0
    %913 = vmatprep.subr.mxu0 0.0
    %914 = vmatpush1.msra.mxu0 0.0
    %915 = vmatprep.subr.mxu0 0.0
    %916 = vmatpush1.msra.mxu0 0.0
    %917 = vmatprep.subr.mxu0 0.0
    %918 = vmatpush1.msra.mxu0 0.0
    %919 = vmatprep.subr.mxu0 0.0
    %920 = vmatpush1.msra.mxu0 0.0
    %921 = vmatprep.subr.mxu0 0.0
    %922 = vmatpush1.msra.mxu0 0.0
    %923 = vmatprep.subr.mxu0 0.0
    %924 = vmatpush1.msra.mxu0 0.0
    %925 = vmatprep.subr.mxu0 0.0
    %926 = vmatpush1.msra.mxu0 0.0
    %927 = vmatprep.subr.mxu0 0.0
    %928 = vmatpush1.msra.mxu0 0.0
    %929 = vmatprep.subr.mxu0 0.0
    %930 = vmatpush1.msra.mxu0 0.0
    %931 = vmatprep.subr.mxu0 0.0
    %932 = vmatpush1.msra.mxu0 %v819
    %933 = vmatprep.subr.mxu0 0.0
    %934 = vmatpush2.msra.mxu0 0.0
    %935 = vmatprep.subr.mxu0 0.0
    %936 = vmatpush2.msra.mxu0 0.0
    %937 = vmatprep.subr.mxu0 0.0
    %938 = vmatpush2.msra.mxu0 0.0
    %939 = vmatprep.subr.mxu0 0.0
    %940 = vmatpush2.msra.mxu0 0.0
    %941 = vmatprep.subr.mxu0 0.0
    %942 = vmatpush2.msra.mxu0 0.0
    %943 = vmatprep.subr.mxu0 0.0
    %944 = vmatpush2.msra.mxu0 0.0
    %945 = vmatprep.subr.mxu0 0.0
    %946 = vmatpush2.msra.mxu0 0.0
    %947 = vmatprep.subr.mxu0 0.0
    %948 = vmatpush2.msra.mxu0 0.0
    %949 = vmatprep.subr.mxu0 0.0
    %950 = vmatpush2.msra.mxu0 0.0
    %951 = vmatprep.subr.mxu0 0.0
    %952 = vmatpush2.msra.mxu0 0.0
    %953 = vmatprep.subr.mxu0 0.0
    %954 = vmatpush2.msra.mxu0 0.0
    %955 = vmatprep.subr.mxu0 0.0
    %956 = vmatpush2.msra.mxu0 0.0
    %957 = vmatprep.subr.mxu0 0.0
    %958 = vmatpush2.msra.mxu0 0.0
    %959 = vmatprep.subr.mxu0 0.0
    %960 = vmatpush2.msra.mxu0 0.0
    %961 = vmatprep.subr.mxu0 0.0
    %962 = vmatpush2.msra.mxu0 0.0
    %963 = vmatprep.subr.mxu0 0.0
    %964 = vmatpush2.msra.mxu0 0.0
    %965 = vmatprep.mubr.f32.mxu0 0.0
    %966 = vmatmul.mubr.f32.gmra.mxu0 %v829
    %v967 = vpop.f32.mrf.mxu0
    %v968 = vadd.f32 0.0, %v967
    %v969 = vpop.f32.mrf.mxu0
    %970 = vdwg.mxu0
    %973 = vrot.lane.b32.xlu0 %v898, 32
    %v974 = vpop.permute.xlu0 %973
    %975 = vrot.lane.b32.xlu0 %v968, 32
    %v976 = vpop.permute.xlu0 %975
    %v979 = vsel %vm155, %v646, %v974
    %v980 = vsel %vm155, %v647, %v976
    %v981 = vld [vmem:[%s8] sm:$0xff]
    %v982 = vld [vmem:[%s8 + $0x8] sm:$0xff]
    %v983 = vld [vmem:[%s8 + $0x10] sm:$0xff]
    %v984 = vld [vmem:[%s8 + $0x18] sm:$0xff]
    %v985 = vld [vmem:[%s8 + $0x20] sm:$0xff]
    %v986 = vld [vmem:[%s8 + $0x28] sm:$0xff]
    %v987 = vld [vmem:[%s8 + $0x30] sm:$0xff]
    %v988 = vld [vmem:[%s8 + $0x38] sm:$0xff]
    %v989 = vld [vmem:[#allocation11] sm:$0x1]
    %v991 = vlaneseq
    %v992 = vshrl.u32 %v991, 7
    %v993 = vsub.s32 0, %v992
    %v994 = vrot.slane %v989, %v993
    %v997 = vsel %vm214, %v979, 0
    %v1000 = vsel %vm214, %v980, 0
    %1002 = vmatprep.subr.mxu0 0.0
    %1003 = vmatpush1.msra.mxu0 0.0
    %1004 = vmatprep.subr.mxu0 0.0
    %1005 = vmatpush1.msra.mxu0 0.0
    %1006 = vmatprep.subr.mxu0 0.0
    %1007 = vmatpush1.msra.mxu0 0.0
    %1008 = vmatprep.subr.mxu0 0.0
    %1009 = vmatpush1.msra.mxu0 0.0
    %1010 = vmatprep.subr.mxu0 0.0
    %1011 = vmatpush1.msra.mxu0 0.0
    %1012 = vmatprep.subr.mxu0 0.0
    %1013 = vmatpush1.msra.mxu0 0.0
    %1014 = vmatprep.subr.mxu0 0.0
    %1015 = vmatpush1.msra.mxu0 0.0
    %1016 = vmatprep.subr.mxu0 0.0
    %1017 = vmatpush1.msra.mxu0 0.0
    %1018 = vmatprep.subr.mxu0 0.0
    %1019 = vmatpush1.msra.mxu0 %v988
    %1020 = vmatprep.subr.mxu0 0.0
    %1021 = vmatpush1.msra.mxu0 %v987
    %1022 = vmatprep.subr.mxu0 0.0
    %1023 = vmatpush1.msra.mxu0 %v986
    %1024 = vmatprep.subr.mxu0 0.0
    %1025 = vmatpush1.msra.mxu0 %v985
    %1026 = vmatprep.subr.mxu0 0.0
    %1027 = vmatpush1.msra.mxu0 %v984
    %1028 = vmatprep.subr.mxu0 0.0
    %1029 = vmatpush1.msra.mxu0 %v983
    %1030 = vmatprep.subr.mxu0 0.0
    %1031 = vmatpush1.msra.mxu0 %v982
    %1032 = vmatprep.subr.mxu0 0.0
    %1033 = vmatpush1.msra.mxu0 %v981
    %1034 = vmatprep.subr.mxu0 0.0
    %1035 = vmatpush2.msra.mxu0 0.0
    %1036 = vmatprep.subr.mxu0 0.0
    %1037 = vmatpush2.msra.mxu0 0.0
    %1038 = vmatprep.subr.mxu0 0.0
    %1039 = vmatpush2.msra.mxu0 0.0
    %1040 = vmatprep.subr.mxu0 0.0
    %1041 = vmatpush2.msra.mxu0 0.0
    %1042 = vmatprep.subr.mxu0 0.0
    %1043 = vmatpush2.msra.mxu0 0.0
    %1044 = vmatprep.subr.mxu0 0.0
    %1045 = vmatpush2.msra.mxu0 0.0
    %1046 = vmatprep.subr.mxu0 0.0
    %1047 = vmatpush2.msra.mxu0 0.0
    %1048 = vmatprep.subr.mxu0 0.0
    %1049 = vmatpush2.msra.mxu0 0.0
    %1050 = vmatprep.subr.mxu0 0.0
    %1051 = vmatpush2.msra.mxu0 0.0
    %1052 = vmatprep.subr.mxu0 0.0
    %1053 = vmatpush2.msra.mxu0 0.0
    %1054 = vmatprep.subr.mxu0 0.0
    %1055 = vmatpush2.msra.mxu0 0.0
    %1056 = vmatprep.subr.mxu0 0.0
    %1057 = vmatpush2.msra.mxu0 0.0
    %1058 = vmatprep.subr.mxu0 0.0
    %1059 = vmatpush2.msra.mxu0 0.0
    %1060 = vmatprep.subr.mxu0 0.0
    %1061 = vmatpush2.msra.mxu0 0.0
    %1062 = vmatprep.subr.mxu0 0.0
    %1063 = vmatpush2.msra.mxu0 0.0
    %1064 = vmatprep.subr.mxu0 0.0
    %1065 = vmatpush2.msra.mxu0 0.0
    %1066 = vmatprep.mubr.f32.mxu0 0.0
    %1067 = vmatmul.mubr.f32.gmra.mxu0 %v997
    %v1068 = vpop.f32.mrf.mxu0
    %v1069 = vadd.f32 %v994, %v1068
    %v1070 = vpop.f32.mrf.mxu0
    %1071 = vmatprep.mubr.f32.mxu0 0.0
    %1072 = vmatmul.mubr.f32.gmra.mxu0 %v1000
    %v1073 = vpop.f32.mrf.mxu0
    %v1074 = vadd.f32 %v994, %v1073
    %v1075 = vpop.f32.mrf.mxu0
    %1076 = vdwg.mxu0
    %v1077 = vmax.f32 %v1069, 0.0
    %v1078 = vmax.f32 %v1074, 0.0
    %v1079 = vld [vmem:[#allocation9] sm:$0xff]
    %v1080 = vld [vmem:[#allocation9 + $0x8] sm:$0xff]
    %v1081 = vld [vmem:[#allocation9 + $0x10] sm:$0xff]
    %v1082 = vld [vmem:[#allocation9 + $0x18] sm:$0xff]
    %v1083 = vld [vmem:[#allocation9 + $0x20] sm:$0xff]
    %v1084 = vld [vmem:[#allocation9 + $0x28] sm:$0xff]
    %v1085 = vld [vmem:[#allocation9 + $0x30] sm:$0xff]
    %v1086 = vld [vmem:[#allocation9 + $0x38] sm:$0xff]
    %v1087 = vld [vmem:[#allocation12] sm:$0x1]
    %v1089 = vlaneseq
    %v1090 = vshrl.u32 %v1089, 7
    %v1091 = vsub.s32 0, %v1090
    %v1092 = vrot.slane %v1087, %v1091
    %1094 = vmatprep.subr.mxu0 0.0
    %1095 = vmatpush1.msra.mxu0 0.0
    %1096 = vmatprep.subr.mxu0 0.0
    %1097 = vmatpush1.msra.mxu0 0.0
    %1098 = vmatprep.subr.mxu0 0.0
    %1099 = vmatpush1.msra.mxu0 0.0
    %1100 = vmatprep.subr.mxu0 0.0
    %1101 = vmatpush1.msra.mxu0 0.0
    %1102 = vmatprep.subr.mxu0 0.0
    %1103 = vmatpush1.msra.mxu0 0.0
    %1104 = vmatprep.subr.mxu0 0.0
    %1105 = vmatpush1.msra.mxu0 0.0
    %1106 = vmatprep.subr.mxu0 0.0
    %1107 = vmatpush1.msra.mxu0 0.0
    %1108 = vmatprep.subr.mxu0 0.0
    %1109 = vmatpush1.msra.mxu0 0.0
    %1110 = vmatprep.subr.mxu0 0.0
    %1111 = vmatpush1.msra.mxu0 %v1086
    %1112 = vmatprep.subr.mxu0 0.0
    %1113 = vmatpush1.msra.mxu0 %v1085
    %1114 = vmatprep.subr.mxu0 0.0
    %1115 = vmatpush1.msra.mxu0 %v1084
    %1116 = vmatprep.subr.mxu0 0.0
    %1117 = vmatpush1.msra.mxu0 %v1083
    %1118 = vmatprep.subr.mxu0 0.0
    %1119 = vmatpush1.msra.mxu0 %v1082
    %1120 = vmatprep.subr.mxu0 0.0
    %1121 = vmatpush1.msra.mxu0 %v1081
    %1122 = vmatprep.subr.mxu0 0.0
    %1123 = vmatpush1.msra.mxu0 %v1080
    %1124 = vmatprep.subr.mxu0 0.0
    %1125 = vmatpush1.msra.mxu0 %v1079
    %1126 = vmatprep.subr.mxu0 0.0
    %1127 = vmatpush2.msra.mxu0 0.0
    %1128 = vmatprep.subr.mxu0 0.0
    %1129 = vmatpush2.msra.mxu0 0.0
    %1130 = vmatprep.subr.mxu0 0.0
    %1131 = vmatpush2.msra.mxu0 0.0
    %1132 = vmatprep.subr.mxu0 0.0
    %1133 = vmatpush2.msra.mxu0 0.0
    %1134 = vmatprep.subr.mxu0 0.0
    %1135 = vmatpush2.msra.mxu0 0.0
    %1136 = vmatprep.subr.mxu0 0.0
    %1137 = vmatpush2.msra.mxu0 0.0
    %1138 = vmatprep.subr.mxu0 0.0
    %1139 = vmatpush2.msra.mxu0 0.0
    %1140 = vmatprep.subr.mxu0 0.0
    %1141 = vmatpush2.msra.mxu0 0.0
    %1142 = vmatprep.subr.mxu0 0.0
    %1143 = vmatpush2.msra.mxu0 0.0
    %1144 = vmatprep.subr.mxu0 0.0
    %1145 = vmatpush2.msra.mxu0 0.0
    %1146 = vmatprep.subr.mxu0 0.0
    %1147 = vmatpush2.msra.mxu0 0.0
    %1148 = vmatprep.subr.mxu0 0.0
    %1149 = vmatpush2.msra.mxu0 0.0
    %1150 = vmatprep.subr.mxu0 0.0
    %1151 = vmatpush2.msra.mxu0 0.0
    %1152 = vmatprep.subr.mxu0 0.0
    %1153 = vmatpush2.msra.mxu0 0.0
    %1154 = vmatprep.subr.mxu0 0.0
    %1155 = vmatpush2.msra.mxu0 0.0
    %1156 = vmatprep.subr.mxu0 0.0
    %1157 = vmatpush2.msra.mxu0 0.0
    %1158 = vmatprep.mubr.f32.mxu0 0.0
    %1159 = vmatmul.mubr.f32.gmra.mxu0 %v997
    %v1160 = vpop.f32.mrf.mxu0
    %v1161 = vadd.f32 %v1092, %v1160
    %v1162 = vpop.f32.mrf.mxu0
    %1163 = vmatprep.mubr.f32.mxu0 0.0
    %1164 = vmatmul.mubr.f32.gmra.mxu0 %v1000
    %v1165 = vpop.f32.mrf.mxu0
    %v1166 = vadd.f32 %v1092, %v1165
    %v1167 = vpop.f32.mrf.mxu0
    %1168 = vdwg.mxu0
    %v1169 = vxor.u32 %v1161, 2147483648
    %v1170 = vxor.u32 %v1166, 2147483648
    %v1171 = vmul.f32 %v1169, 1.442695
    %v1172 = vpow.pop %v1171
    %v1173 = vmul.f32 %v1170, 1.442695
    %v1174 = vpow.pop %v1173
    %v1175 = vadd.f32 %v1172, 1.0
    %v1176 = vadd.f32 %v1174, 1.0
    %v1177 = vrcp.pop %v1175
    %v1178 = vmul.f32 1.0, %v1177
    %v1179 = vrcp.pop %v1176
    %v1180 = vmul.f32 1.0, %v1179
    %v1181 = vmul.f32 %v1178, %v979
    %v1182 = vmul.f32 %v1180, %v980
    %v1183 = vsub.f32 1.0, %v1178
    %v1184 = vsub.f32 1.0, %v1180
    %v1185 = vmul.f32 %v1183, %v1077
    %v1186 = vmul.f32 %v1184, %v1078
    %v1187 = vadd.f32 %v1181, %v1185
    %v1188 = vadd.f32 %v1182, %v1186
    %v1189 = vld [vmem:[%s12] sm:$0xff]
    %v1190 = vld [vmem:[%s12 + $0x8] sm:$0xff]
    %v1191 = vld [vmem:[%s12 + $0x10] sm:$0xff]
    %v1192 = vld [vmem:[%s12 + $0x18] sm:$0xff]
    %v1193 = vld [vmem:[%s12 + $0x20] sm:$0xff]
    %v1194 = vld [vmem:[%s12 + $0x28] sm:$0xff]
    %v1195 = vld [vmem:[%s12 + $0x30] sm:$0xff]
    %v1196 = vld [vmem:[%s12 + $0x38] sm:$0xff]
    %v1197 = vld [vmem:[%s13] sm:$0x1]
    %v1199 = vlaneseq
    %v1200 = vshrl.u32 %v1199, 7
    %v1201 = vsub.s32 0, %v1200
    %v1202 = vrot.slane %v1197, %v1201
    %v1205 = vsel %vm214, %v1187, 0
    %v1208 = vsel %vm214, %v1188, 0
    %1210 = vmatprep.subr.mxu0 0.0
    %1211 = vmatpush1.msra.mxu0 0.0
    %1212 = vmatprep.subr.mxu0 0.0
    %1213 = vmatpush1.msra.mxu0 0.0
    %1214 = vmatprep.subr.mxu0 0.0
    %1215 = vmatpush1.msra.mxu0 0.0
    %1216 = vmatprep.subr.mxu0 0.0
    %1217 = vmatpush1.msra.mxu0 0.0
    %1218 = vmatprep.subr.mxu0 0.0
    %1219 = vmatpush1.msra.mxu0 0.0
    %1220 = vmatprep.subr.mxu0 0.0
    %1221 = vmatpush1.msra.mxu0 0.0
    %1222 = vmatprep.subr.mxu0 0.0
    %1223 = vmatpush1.msra.mxu0 0.0
    %1224 = vmatprep.subr.mxu0 0.0
    %1225 = vmatpush1.msra.mxu0 0.0
    %1226 = vmatprep.subr.mxu0 0.0
    %1227 = vmatpush1.msra.mxu0 %v1196
    %1228 = vmatprep.subr.mxu0 0.0
    %1229 = vmatpush1.msra.mxu0 %v1195
    %1230 = vmatprep.subr.mxu0 0.0
    %1231 = vmatpush1.msra.mxu0 %v1194
    %1232 = vmatprep.subr.mxu0 0.0
    %1233 = vmatpush1.msra.mxu0 %v1193
    %1234 = vmatprep.subr.mxu0 0.0
    %1235 = vmatpush1.msra.mxu0 %v1192
    %1236 = vmatprep.subr.mxu0 0.0
    %1237 = vmatpush1.msra.mxu0 %v1191
    %1238 = vmatprep.subr.mxu0 0.0
    %1239 = vmatpush1.msra.mxu0 %v1190
    %1240 = vmatprep.subr.mxu0 0.0
    %1241 = vmatpush1.msra.mxu0 %v1189
    %1242 = vmatprep.subr.mxu0 0.0
    %1243 = vmatpush2.msra.mxu0 0.0
    %1244 = vmatprep.subr.mxu0 0.0
    %1245 = vmatpush2.msra.mxu0 0.0
    %1246 = vmatprep.subr.mxu0 0.0
    %1247 = vmatpush2.msra.mxu0 0.0
    %1248 = vmatprep.subr.mxu0 0.0
    %1249 = vmatpush2.msra.mxu0 0.0
    %1250 = vmatprep.subr.mxu0 0.0
    %1251 = vmatpush2.msra.mxu0 0.0
    %1252 = vmatprep.subr.mxu0 0.0
    %1253 = vmatpush2.msra.mxu0 0.0
    %1254 = vmatprep.subr.mxu0 0.0
    %1255 = vmatpush2.msra.mxu0 0.0
    %1256 = vmatprep.subr.mxu0 0.0
    %1257 = vmatpush2.msra.mxu0 0.0
    %1258 = vmatprep.subr.mxu0 0.0
    %1259 = vmatpush2.msra.mxu0 0.0
    %1260 = vmatprep.subr.mxu0 0.0
    %1261 = vmatpush2.msra.mxu0 0.0
    %1262 = vmatprep.subr.mxu0 0.0
    %1263 = vmatpush2.msra.mxu0 0.0
    %1264 = vmatprep.subr.mxu0 0.0
    %1265 = vmatpush2.msra.mxu0 0.0
    %1266 = vmatprep.subr.mxu0 0.0
    %1267 = vmatpush2.msra.mxu0 0.0
    %1268 = vmatprep.subr.mxu0 0.0
    %1269 = vmatpush2.msra.mxu0 0.0
    %1270 = vmatprep.subr.mxu0 0.0
    %1271 = vmatpush2.msra.mxu0 0.0
    %1272 = vmatprep.subr.mxu0 0.0
    %1273 = vmatpush2.msra.mxu0 0.0
    %1274 = vmatprep.mubr.f32.mxu0 0.0
    %1275 = vmatmul.mubr.f32.gmra.mxu0 %v1205
    %v1276 = vpop.f32.mrf.mxu0
    %v1277 = vadd.f32 %v1202, %v1276
    %v1278 = vpop.f32.mrf.mxu0
    %1279 = vmatprep.mubr.f32.mxu0 0.0
    %1280 = vmatmul.mubr.f32.gmra.mxu0 %v1208
    %v1281 = vpop.f32.mrf.mxu0
    %v1282 = vadd.f32 %v1202, %v1281
    %v1283 = vpop.f32.mrf.mxu0
    %1284 = vdwg.mxu0
    %1285 = vst.msk [vmem:[#allocation14] sm:$0xff] %vm155, %v1277
    %1286 = vst.msk [vmem:[#allocation14 + $0x8] sm:$0xff] %vm155, %v1282
    // Predicated region
    $region82: #{cnn_lm_forward.1} parent=1 // pred_check
      _
    $region83: #{cnn_lm_forward.1} parent=1 // pred_check_branch
      %1288 = sbr.rel (0) target = $region85
    $region84: #{cnn_lm_forward.1} parent=1 // pred_region
      %s1290 = ssub.s32 256, 256
      %1291 = vsyncadd [#allocation5], %s1290
      %s1292 = sshll.u32 [#allocation14], 4
      %s1293 = int_to_ptr.vmem [resolvable:$true] %s1292
      %1298 = dma.vmem_to_hbm [thread:$0]  %s1293, 256, %s14, [#allocation5], 128, 128, 8
    $region85: #{cnn_lm_forward.1} parent=1 // pred_fallthru
      _
    // Predicated region
    $region86: #{cnn_lm_forward.1} parent=1 // pred_check
      _
    $region87: #{cnn_lm_forward.1} parent=1 // pred_check_branch
      %1300 = sbr.rel (0) target = $region89
    $region88: #{cnn_lm_forward.1} parent=1 // pred_region
      %1301 = dma.done [#allocation5], 256
    $region89: #{cnn_lm_forward.1} parent=1 // pred_fallthru
      _
    %1302 = vsyncpa [#allocation4], 1
    %1303 = vsyncpa [#allocation7], 1
    %1304 = vsyncpa [#allocation10], 1
    %1305 = vsyncpa [#allocation13], 1
    %1306 = vsyncpa [#allocation5], 1

</llo_original>
